<compile_context>
chip_gen: v7x
topology: tpu7x:2x2x1
jax: 0.10.0
libtpu: 0.0.40
codegen_flags: <defaults>
</compile_context>

<pallas_src>
import functools

import jax
import jax.numpy as jnp
from jax.experimental import pallas as pl
from jax.experimental.pallas import tpu as pltpu


def _round_up(v, m):
    return (v + m - 1) // m * m


# ----------------------------------------------------------------------------
# Fused kernel: 3x3 conv (deep) + 1x1 conv (shallow, center tap)
#               + InstanceNorm2d on both branches + channel concat.
#
# Per grid step (one image n, one channel block c):
#   x_ref : (1, Cin, Lp)     zero-padded, spatially flattened NCHW image
#   w_ref : (Cb, 9*Cin)      fused taps, k-major columns (k*Cin + cin)
#   g/bt  : (Cb, 1)          gamma / beta (deep rows first, then shallow)
#   o_ref : (1, Cb, Lc)      Lc = H*Wp rounded up to 128; junk columns are the
#                            2 padded-width cols per row + the lane-pad tail
# ----------------------------------------------------------------------------
def _branch_join_kernel(x_ref, w_ref, g_ref, bt_ref, o_ref, *,
                        wp, w_valid, l_valid, lc, inv_count, eps):
    # --- fused conv as ONE stacked-K MXU matmul ------------------------------
    # Tap k = kh*3 + kw of the 3x3 conv reads the padded image at flat offset
    # kh*Wp + kw; the shallow 1x1 conv is exactly the center tap (k == 4).
    taps = [x_ref[0, :, pl.ds((k // 3) * wp + (k % 3), lc)] for k in range(9)]
    slab = jnp.concatenate(taps, axis=0)                       # (9*Cin, Lc)
    acc = jnp.dot(w_ref[...], slab,
                  preferred_element_type=jnp.float32)          # (Cb, Lc) f32
    # NOTE: conv bias intentionally omitted — it is cancelled by the instance
    # norm mean subtraction.

    # --- instance-norm statistics on the MXU ---------------------------------
    # Valid-pixel mask built in-kernel: flat column q is a real output pixel iff
    # q < H*Wp and (q mod Wp) < W.  Shaped (Lc, 1) so the masked sum and
    # sum-of-squares become MXU mat-vecs (VALU/XLU are the binding slots here).
    q = jax.lax.broadcasted_iota(jnp.int32, (lc, 1), 0)
    mask = jnp.logical_and(q < l_valid, q % wp < w_valid).astype(jnp.float32)
    s1 = jnp.dot(acc, mask, preferred_element_type=jnp.float32)         # (Cb,1)
    s2 = jnp.dot(acc * acc, mask, preferred_element_type=jnp.float32)   # (Cb,1)

    mean = s1 * inv_count
    var = jnp.maximum(s2 * inv_count - mean * mean, 0.0)       # biased variance
    scale = g_ref[...] * jax.lax.rsqrt(var + eps)              # rsqrt -> EUP
    shift = bt_ref[...] - mean * scale
    o_ref[0] = (acc * scale + shift).astype(o_ref.dtype)       # one FMA/element


# ----------------------------------------------------------------------------
# Parameter fusion (hoisted out of the per-call jit; run once).
# ----------------------------------------------------------------------------
def fuse_params(params, *, ct_pad=None, compute_dtype=jnp.bfloat16):
    wd = jnp.asarray(params["deep_w"], jnp.float32)      # (Cd, Cin, 3, 3)
    ws = jnp.asarray(params["shallow_w"], jnp.float32)   # (Cs, Cin, 1, 1)
    Cd, Cin = wd.shape[0], wd.shape[1]
    Cs = ws.shape[0]
    Ct = Cd + Cs
    if ct_pad is None:
        ct_pad = _round_up(Ct, 8)
    K = 9 * Cin

    w = jnp.zeros((ct_pad, K), jnp.float32)
    deep = jnp.transpose(wd, (0, 2, 3, 1)).reshape(Cd, K)    # columns k*Cin+cin
    w = w.at[:Cd, :].set(deep)
    w = w.at[Cd:Ct, 4 * Cin:5 * Cin].set(ws.reshape(Cs, Cin))  # center tap only

    gamma = jnp.zeros((ct_pad, 1), jnp.float32).at[:Ct, 0].set(
        jnp.concatenate([jnp.asarray(params["gamma_d"], jnp.float32),
                         jnp.asarray(params["gamma_s"], jnp.float32)]))
    beta = jnp.zeros((ct_pad, 1), jnp.float32).at[:Ct, 0].set(
        jnp.concatenate([jnp.asarray(params["beta_d"], jnp.float32),
                         jnp.asarray(params["beta_s"], jnp.float32)]))
    # deep_b / shallow_b are deliberately unused: provably cancelled by the norm.
    return {"w": w.astype(compute_dtype), "gamma": gamma, "beta": beta,
            "out_channels": Ct}


# ----------------------------------------------------------------------------
# Jittable apply (fused params precomputed outside).
# ----------------------------------------------------------------------------
def branch_block_apply(x, w_stacked, gamma, beta, *, out_channels,
                       channel_block=None):
    """x: (N, Cin, H, W).  Returns (N, out_channels, H, W) float32."""
    N, Cin, H, W = x.shape
    Ct_pad = w_stacked.shape[0]
    cblk = Ct_pad if channel_block is None else int(channel_block)
    if cblk % 8 != 0 or Ct_pad % cblk != 0:
        raise ValueError("channel_block must divide padded channels and be a "
                         "multiple of 8")

    Wp = W + 2
    L = H * Wp                         # real output columns (incl. 2 junk/row)
    Lc = _round_up(L, 128)             # lane-dense compute/output length
    need = 2 * Wp + 2 + Lc             # max exclusive flat read index
    rows = -(-need // Wp)              # total padded rows (1 top + H + bottom)
    Lp = rows * Wp

    # Single fused pad (top 1, bottom rows-H-1, left/right 1), then flatten;
    # the input stays NCHW (no transpose anywhere).
    xp = jnp.pad(x, ((0, 0), (0, 0), (1, rows - H - 1), (1, 1)))
    xp = xp.reshape(N, Cin, Lp).astype(w_stacked.dtype)

    cb_grid = Ct_pad // cblk
    kernel = functools.partial(
        _branch_join_kernel, wp=Wp, w_valid=W, l_valid=L, lc=Lc,
        inv_count=1.0 / float(H * W), eps=1e-5)

    # Size the VMEM budget from the actual block footprint (v7x has only 64 MiB).
    in_bytes = w_stacked.dtype.itemsize
    vmem_est = (2 * Cin * Lp * in_bytes          # double-buffered input block
                + 2 * cblk * Lc * 4              # double-buffered output block
                + 9 * Cin * Lc * in_bytes        # stacked tap slab
                + 4 * cblk * Lc * 4              # acc / acc^2 / epilogue temps
                + 4 * Cin * Lc * in_bytes)       # shifted-slice temporaries
    vmem_limit = int(min(64 * 1024 * 1024, max(16 * 1024 * 1024, 2 * vmem_est)))

    out = pl.pallas_call(
        kernel,
        out_shape=jax.ShapeDtypeStruct((N, Ct_pad, Lc), jnp.float32),
        grid_spec=pltpu.PrefetchScalarGridSpec(
            num_scalar_prefetch=0,
            grid=(N, cb_grid),
            in_specs=[
                pl.BlockSpec((1, Cin, Lp), lambda n, c: (n, 0, 0)),  # image
                pl.BlockSpec((cblk, 9 * Cin), lambda n, c: (c, 0)),  # fused taps
                pl.BlockSpec((cblk, 1), lambda n, c: (c, 0)),        # gamma
                pl.BlockSpec((cblk, 1), lambda n, c: (c, 0)),        # beta
            ],
            out_specs=pl.BlockSpec((1, cblk, Lc), lambda n, c: (n, c, 0)),
        ),
        compiler_params=pltpu.CompilerParams(
            dimension_semantics=("parallel", "parallel"),
            vmem_limit_bytes=vmem_limit,
        ),
    )(xp, w_stacked, gamma, beta)

    # Crop lane-pad tail + padded-width junk columns; channel order is already
    # the concatenated [deep, shallow] NCHW order.
    out = out[:, :out_channels, :L].reshape(N, out_channels, H, Wp)
    return out[:, :, :, :W]


def branch_block_forward(x, params, *, compute_dtype=jnp.bfloat16,
                         channel_block=None):
    """Convenience wrapper (fuses params per call; prefer fuse_params + apply)."""
    Ct = params["deep_w"].shape[0] + params["shallow_w"].shape[0]
    ct_pad = _round_up(Ct, 8 if channel_block is None else channel_block)
    fused = fuse_params(params, ct_pad=ct_pad, compute_dtype=compute_dtype)
    return branch_block_apply(x, fused["w"], fused["gamma"], fused["beta"],
                              out_channels=Ct, channel_block=channel_block)


# ----------------------------------------------------------------------------
# Pure-JAX reference (for correctness check)
# ----------------------------------------------------------------------------
def _reference(x, params, eps=1e-5):
    dn = ("NCHW", "OIHW", "NCHW")
    deep = jax.lax.conv_general_dilated(
        x, params["deep_w"], (1, 1), "SAME", dimension_numbers=dn)
    deep = deep + params["deep_b"][None, :, None, None]
    shallow = jax.lax.conv_general_dilated(
        x, params["shallow_w"], (1, 1), "VALID", dimension_numbers=dn)
    shallow = shallow + params["shallow_b"][None, :, None, None]

    def inorm(v, g, b):
        m = jnp.mean(v, axis=(2, 3), keepdims=True)
        var = jnp.mean(jnp.square(v - m), axis=(2, 3), keepdims=True)
        return (v - m) * jax.lax.rsqrt(var + eps) * g[None, :, None, None] \
            + b[None, :, None, None]

    return jnp.concatenate(
        [inorm(deep, params["gamma_d"], params["beta_d"]),
         inorm(shallow, params["gamma_s"], params["beta_s"])], axis=1)


# ----------------------------------------------------------------------------
if __name__ == "__main__":
    key = jax.random.PRNGKey(0)
    N, Cin, H, W = 2, 4, 16, 16
    Cd, Cs = 8, 4  # deep / shallow branch out_channels
    Ct = Cd + Cs

    ks = jax.random.split(key, 8)
    x = jax.random.normal(ks[0], (N, Cin, H, W), jnp.float32)

    params = {
        "deep_w": jax.random.normal(ks[1], (Cd, Cin, 3, 3), jnp.float32)
                  / jnp.sqrt(Cin * 9.0),
        "deep_b": 0.1 * jax.random.normal(ks[2], (Cd,), jnp.float32),
        "shallow_w": jax.random.normal(ks[3], (Cs, Cin, 1, 1), jnp.float32)
                     / jnp.sqrt(float(Cin)),
        "shallow_b": 0.1 * jax.random.normal(ks[4], (Cs,), jnp.float32),
        # InstanceNorm affine params (nontrivial values to exercise the path).
        "gamma_d": 1.0 + 0.1 * jax.random.normal(ks[5], (Cd,), jnp.float32),
        "beta_d": 0.1 * jax.random.normal(ks[6], (Cd,), jnp.float32),
        "gamma_s": 1.0 + 0.1 * jax.random.normal(ks[7], (Cs,), jnp.float32),
        "beta_s": jnp.linspace(-0.1, 0.1, Cs, dtype=jnp.float32),
    }

    ref = jax.block_until_ready(_reference(x, params))

    apply = jax.jit(branch_block_apply,
                    static_argnames=("out_channels", "channel_block"))

    # Weight/gamma/beta fusion hoisted out of the jitted apply (done once).
    fused_f32 = fuse_params(params, compute_dtype=jnp.float32)
    fused_bf16 = fuse_params(params)                       # bf16 default

    # f32 path, full channel block: tight check against the reference
    # (conv bias is absent in the kernel — InstanceNorm cancels it exactly).
    out = jax.block_until_ready(apply(
        x, fused_f32["w"], fused_f32["gamma"], fused_f32["beta"],
        out_channels=Ct, channel_block=None))
    assert out.shape == (N, Ct, H, W), out.shape
    assert jnp.allclose(out, ref, rtol=1e-4, atol=1e-3), \
        float(jnp.max(jnp.abs(out - ref)))

    # f32 path with channel-split grid (v7x second-TC path); exact split since
    # instance-norm statistics are per channel.
    out_split = jax.block_until_ready(apply(
        x, fused_f32["w"], fused_f32["gamma"], fused_f32["beta"],
        out_channels=Ct, channel_block=8))
    assert out_split.shape == (N, Ct, H, W), out_split.shape
    assert jnp.allclose(out_split, ref, rtol=1e-4, atol=1e-3), \
        float(jnp.max(jnp.abs(out_split - ref)))

    # bf16 default compute path (v6e/v7x feedback): looser tolerance, norm math f32.
    out_bf16 = jax.block_until_ready(apply(
        x, fused_bf16["w"], fused_bf16["gamma"], fused_bf16["beta"],
        out_channels=Ct, channel_block=None))
    assert out_bf16.shape == (N, Ct, H, W), out_bf16.shape
    assert jnp.allclose(out_bf16, ref, rtol=1e-1, atol=1e-1), \
        float(jnp.max(jnp.abs(out_bf16 - ref)))

    print("KERNEL_OK")
</pallas_src>

<mosaic_0001>
module attributes {stable_mosaic.version = 11 : i64} {
  func.func @_branch_join_kernel(%arg0: i32, %arg1: i32, %arg2: memref<1x4x432xf32, #tpu.memory_space<vmem>>, %arg3: memref<16x36xf32, #tpu.memory_space<vmem>>, %arg4: memref<16x1xf32, #tpu.memory_space<vmem>>, %arg5: memref<16x1xf32, #tpu.memory_space<vmem>>, %arg6: memref<1x16x384xf32, #tpu.memory_space<vmem>>) attributes {dimension_semantics = [#tpu.dimension_semantics<parallel>, #tpu.dimension_semantics<parallel>], iteration_bounds = array<i64: 2, 1>, scalar_prefetch = 0 : i64, scratch_operands = 0 : i64, tpu.core_type = #tpu.core_type<tc>, window_params = [{transform_indices = @transform_0, window_bounds = array<i64: 1, 4, 432>}, {transform_indices = @transform_1, window_bounds = array<i64: 16, 36>}, {transform_indices = @transform_2, window_bounds = array<i64: 16, 1>}, {transform_indices = @transform_3, window_bounds = array<i64: 16, 1>}, {transform_indices = @transform_4, window_bounds = array<i64: 1, 16, 384>}]} {
    %c0 = arith.constant 0 : index
    %c0_0 = arith.constant 0 : index
    %c0_1 = arith.constant 0 : index
    %0 = vector.load %arg2[%c0, %c0_0, %c0_1] : memref<1x4x432xf32, #tpu.memory_space<vmem>>, vector<1x4x384xf32>
    %1 = vector.shape_cast %0 : vector<1x4x384xf32> to vector<4x384xf32>
    %c0_2 = arith.constant 0 : index
    %c0_3 = arith.constant 0 : index
    %c1 = arith.constant 1 : index
    %2 = vector.load %arg2[%c0_2, %c0_3, %c1] : memref<1x4x432xf32, #tpu.memory_space<vmem>>, vector<1x4x384xf32>
    %3 = vector.shape_cast %2 : vector<1x4x384xf32> to vector<4x384xf32>
    %c0_4 = arith.constant 0 : index
    %c0_5 = arith.constant 0 : index
    %c2 = arith.constant 2 : index
    %4 = vector.load %arg2[%c0_4, %c0_5, %c2] : memref<1x4x432xf32, #tpu.memory_space<vmem>>, vector<1x4x384xf32>
    %5 = vector.shape_cast %4 : vector<1x4x384xf32> to vector<4x384xf32>
    %c0_6 = arith.constant 0 : index
    %c0_7 = arith.constant 0 : index
    %c18 = arith.constant 18 : index
    %6 = vector.load %arg2[%c0_6, %c0_7, %c18] : memref<1x4x432xf32, #tpu.memory_space<vmem>>, vector<1x4x384xf32>
    %7 = vector.shape_cast %6 : vector<1x4x384xf32> to vector<4x384xf32>
    %c0_8 = arith.constant 0 : index
    %c0_9 = arith.constant 0 : index
    %c19 = arith.constant 19 : index
    %8 = vector.load %arg2[%c0_8, %c0_9, %c19] : memref<1x4x432xf32, #tpu.memory_space<vmem>>, vector<1x4x384xf32>
    %9 = vector.shape_cast %8 : vector<1x4x384xf32> to vector<4x384xf32>
    %c0_10 = arith.constant 0 : index
    %c0_11 = arith.constant 0 : index
    %c20 = arith.constant 20 : index
    %10 = vector.load %arg2[%c0_10, %c0_11, %c20] : memref<1x4x432xf32, #tpu.memory_space<vmem>>, vector<1x4x384xf32>
    %11 = vector.shape_cast %10 : vector<1x4x384xf32> to vector<4x384xf32>
    %c0_12 = arith.constant 0 : index
    %c0_13 = arith.constant 0 : index
    %c36 = arith.constant 36 : index
    %12 = vector.load %arg2[%c0_12, %c0_13, %c36] : memref<1x4x432xf32, #tpu.memory_space<vmem>>, vector<1x4x384xf32>
    %13 = vector.shape_cast %12 : vector<1x4x384xf32> to vector<4x384xf32>
    %c0_14 = arith.constant 0 : index
    %c0_15 = arith.constant 0 : index
    %c37 = arith.constant 37 : index
    %14 = vector.load %arg2[%c0_14, %c0_15, %c37] : memref<1x4x432xf32, #tpu.memory_space<vmem>>, vector<1x4x384xf32>
    %15 = vector.shape_cast %14 : vector<1x4x384xf32> to vector<4x384xf32>
    %c0_16 = arith.constant 0 : index
    %c0_17 = arith.constant 0 : index
    %c38 = arith.constant 38 : index
    %16 = vector.load %arg2[%c0_16, %c0_17, %c38] : memref<1x4x432xf32, #tpu.memory_space<vmem>>, vector<1x4x384xf32>
    %17 = vector.shape_cast %16 : vector<1x4x384xf32> to vector<4x384xf32>
    %18 = tpu.concatenate %1, %3, %5, %7, %9, %11, %13, %15, %17 in 0 : vector<4x384xf32>, vector<4x384xf32>, vector<4x384xf32>, vector<4x384xf32>, vector<4x384xf32>, vector<4x384xf32>, vector<4x384xf32>, vector<4x384xf32>, vector<4x384xf32> -> vector<36x384xf32>
    %c0_18 = arith.constant 0 : index
    %c0_19 = arith.constant 0 : index
    %19 = vector.load %arg3[%c0_18, %c0_19] : memref<16x36xf32, #tpu.memory_space<vmem>>, vector<16x36xf32>
    %cst = arith.constant dense<0.000000e+00> : vector<16x384xf32>
    %20 = tpu.matmul %19, %18, %cst {dimension_numbers = #tpu.dot_dimension_numbers<[1], [0], [0], [1], [0, 0, 1, 1], [], []>} : vector<16x36xf32>, vector<36x384xf32>, vector<16x384xf32> -> vector<16x384xf32>
    %21 = tpu.iota {dimensions = array<i32: 0>} : vector<384x1xi32>
    %c288_i32 = arith.constant 288 : i32
    %22 = vector.broadcast %c288_i32 : i32 to vector<384x1xi32>
    %23 = arith.cmpi slt, %21, %22 : vector<384x1xi32>
    %c18_i32 = arith.constant 18 : i32
    %c0_i32 = arith.constant 0 : i32
    %24 = arith.cmpi eq, %c18_i32, %c0_i32 : i32
    %c1_i32 = arith.constant 1 : i32
    %25 = arith.select %24, %c1_i32, %c18_i32 : i32
    %26 = vector.broadcast %25 : i32 to vector<384x1xi32>
    %27 = arith.remsi %21, %26 : vector<384x1xi32>
    %c0_i32_20 = arith.constant 0 : i32
    %28 = vector.broadcast %c0_i32_20 : i32 to vector<384x1xi32>
    %29 = arith.cmpi ne, %27, %28 : vector<384x1xi32>
    %c0_i32_21 = arith.constant 0 : i32
    %30 = vector.broadcast %c0_i32_21 : i32 to vector<384x1xi32>
    %31 = arith.cmpi slt, %27, %30 : vector<384x1xi32>
    %c0_i32_22 = arith.constant 0 : i32
    %32 = arith.cmpi slt, %25, %c0_i32_22 : i32
    %33 = vector.broadcast %32 : i1 to vector<384x1xi1>
    %34 = vector.broadcast %33 : vector<384x1xi1> to vector<384x1xi1>
    %35 = arith.xori %31, %34 : vector<384x1xi1>
    %36 = arith.andi %35, %29 : vector<384x1xi1>
    %37 = vector.broadcast %25 : i32 to vector<384x1xi32>
    %38 = arith.addi %27, %37 : vector<384x1xi32>
    %39 = arith.select %36, %38, %27 : vector<384x1xi1>, vector<384x1xi32>
    %c16_i32 = arith.constant 16 : i32
    %40 = vector.broadcast %c16_i32 : i32 to vector<384x1xi32>
    %41 = arith.cmpi slt, %39, %40 : vector<384x1xi32>
    %42 = arith.andi %23, %41 : vector<384x1xi1>
    %43 = arith.extui %42 : vector<384x1xi1> to vector<384x1xi32>
    %44 = arith.sitofp %43 : vector<384x1xi32> to vector<384x1xf32>
    %cst_23 = arith.constant dense<0.000000e+00> : vector<16x1xf32>
    %45 = tpu.matmul %20, %44, %cst_23 {dimension_numbers = #tpu.dot_dimension_numbers<[1], [0], [0], [1], [0, 0, 1, 1], [], []>} : vector<16x384xf32>, vector<384x1xf32>, vector<16x1xf32> -> vector<16x1xf32>
    %46 = arith.mulf %20, %20 : vector<16x384xf32>
    %cst_24 = arith.constant dense<0.000000e+00> : vector<16x1xf32>
    %47 = tpu.matmul %46, %44, %cst_24 {dimension_numbers = #tpu.dot_dimension_numbers<[1], [0], [0], [1], [0, 0, 1, 1], [], []>} : vector<16x384xf32>, vector<384x1xf32>, vector<16x1xf32> -> vector<16x1xf32>
    %cst_25 = arith.constant 3.906250e-03 : f32
    %48 = vector.broadcast %cst_25 : f32 to vector<16x1xf32>
    %49 = arith.mulf %45, %48 : vector<16x1xf32>
    %cst_26 = arith.constant 3.906250e-03 : f32
    %50 = vector.broadcast %cst_26 : f32 to vector<16x1xf32>
    %51 = arith.mulf %47, %50 : vector<16x1xf32>
    %52 = arith.mulf %49, %49 : vector<16x1xf32>
    %53 = arith.subf %51, %52 : vector<16x1xf32>
    %cst_27 = arith.constant 0.000000e+00 : f32
    %54 = vector.broadcast %cst_27 : f32 to vector<16x1xf32>
    %55 = arith.maximumf %53, %54 : vector<16x1xf32>
    %c0_28 = arith.constant 0 : index
    %c0_29 = arith.constant 0 : index
    %56 = vector.load %arg4[%c0_28, %c0_29] : memref<16x1xf32, #tpu.memory_space<vmem>>, vector<16x1xf32>
    %cst_30 = arith.constant 9.99999974E-6 : f32
    %57 = vector.broadcast %cst_30 : f32 to vector<16x1xf32>
    %58 = arith.addf %55, %57 : vector<16x1xf32>
    %59 = math.rsqrt %58 : vector<16x1xf32>
    %60 = arith.mulf %56, %59 : vector<16x1xf32>
    %c0_31 = arith.constant 0 : index
    %c0_32 = arith.constant 0 : index
    %61 = vector.load %arg5[%c0_31, %c0_32] : memref<16x1xf32, #tpu.memory_space<vmem>>, vector<16x1xf32>
    %62 = arith.mulf %49, %60 : vector<16x1xf32>
    %63 = arith.subf %61, %62 : vector<16x1xf32>
    %64 = vector.broadcast %60 : vector<16x1xf32> to vector<16x384xf32>
    %65 = arith.mulf %20, %64 : vector<16x384xf32>
    %66 = vector.broadcast %63 : vector<16x1xf32> to vector<16x384xf32>
    %67 = arith.addf %65, %66 : vector<16x384xf32>
    %c0_33 = arith.constant 0 : index
    %c0_34 = arith.constant 0 : index
    %c0_35 = arith.constant 0 : index
    %68 = vector.load %arg6[%c0_33, %c0_34, %c0_35] : memref<1x16x384xf32, #tpu.memory_space<vmem>>, vector<1x16x384xf32>
    %69 = vector.shape_cast %68 : vector<1x16x384xf32> to vector<16x384xf32>
    %70 = vector.shape_cast %67 : vector<16x384xf32> to vector<1x16x384xf32>
    tpu.vector_store %arg6[%c0_33, %c0_34, %c0_35], %70 {strides = array<i32>} : memref<1x16x384xf32, #tpu.memory_space<vmem>>, vector<1x16x384xf32>,
    return
  }
  func.func @transform_0(%arg0: i32, %arg1: i32) -> (i32, i32, i32) {
    %c0_i32 = arith.constant 0 : i32
    %c0_i32_0 = arith.constant 0 : i32
    %c0_i32_1 = arith.constant 0 : i32
    return %arg0, %c0_i32, %c0_i32_0 : i32, i32, i32
  }
  func.func @transform_1(%arg0: i32, %arg1: i32) -> (i32, i32) {
    %c0_i32 = arith.constant 0 : i32
    %c0_i32_0 = arith.constant 0 : i32
    return %arg1, %c0_i32 : i32, i32
  }
  func.func @transform_2(%arg0: i32, %arg1: i32) -> (i32, i32) {
    %c0_i32 = arith.constant 0 : i32
    %c0_i32_0 = arith.constant 0 : i32
    return %arg1, %c0_i32 : i32, i32
  }
  func.func @transform_3(%arg0: i32, %arg1: i32) -> (i32, i32) {
    %c0_i32 = arith.constant 0 : i32
    %c0_i32_0 = arith.constant 0 : i32
    return %arg1, %c0_i32 : i32, i32
  }
  func.func @transform_4(%arg0: i32, %arg1: i32) -> (i32, i32, i32) {
    %c0_i32 = arith.constant 0 : i32
    %c0_i32_0 = arith.constant 0 : i32
    return %arg0, %arg1, %c0_i32 : i32, i32, i32
  }
}

</mosaic_0001>

<llo_original>
// kernel: branch_block_apply.1
$region0: #{branch_block_apply.1}
  #allocation0 [shape = 'u32[]', space=smem, size = 0x4, offset = 0x4, fixed_abs, tag = 'smem constant byte address 0x4 - core index']
  #allocation1 [shape = 'u32[144,128]{1,0:T(1,128)}', space=vmem, size = 0x12000, scoped, tag = 'internal scratch']
  %s0 = inlined_call_operand.vmem [shape: f32[2,4,432], index: 0, kind: input, shape index: {}]
  %s1 = inlined_call_operand.vmem [shape: f32[16,36], index: 1, kind: input, shape index: {}]
  %s2 = inlined_call_operand.vmem [shape: f32[16,1], index: 2, kind: input, shape index: {}]
  %s3 = inlined_call_operand.vmem [shape: f32[16,1], index: 3, kind: input, shape index: {}]
  %s4 = inlined_call_operand.vmem [shape: f32[2,16,384], index: 4, kind: output, shape index: {}]
  %s5 = sld [smem:[#allocation0]]
  $region49: #{branch_block_apply.1} parent=0
    _
  %s7 = ssub.s32 1, %s5
  %s8 = scalar_select 0, %s7, %s5
  loop: start=0, step=1, limit=4
  $region2: #{branch_block_apply.1} parent=0 // loop_pre_header
    _
  $region3: #{branch_block_apply.1} parent=0 // loop_header
    %s10 = sphi 0, %s14
    %p11 = scmp.ge.s32.totalorder %s10, 4
    %s17 = sphi 0, %s29
    %s18 = sphi 0, %s25
    %s19 = sphi 0, %s17
    %s20 = sphi 0, %s18
    %s21 = sphi 0, %s19
    %s22 = sphi 0, %s20
    %s32 = sphi 0, %s34
    %s35 = sphi 0, %s32
    %s36 = sphi 0, %s35
    %s52 = sphi 0, %s36
    %s58 = sphi 0, %s60
    %s61 = sphi 0, %s58
    %s62 = sphi 0, %s61
    %s78 = sphi 0, %s62
    %s84 = sphi 0, %s86
    %s87 = sphi 0, %s84
    %s88 = sphi 0, %s87
    %s104 = sphi 0, %s88
    %s110 = sphi 0, %s112
    %s113 = sphi 0, %s110
    %s114 = sphi 0, %s113
    %s130 = sphi 0, %s114
    %s138 = sphi 0, %s140
    %s141 = sphi 0, %s138
    %s142 = sphi 0, %s141
    %s158 = sphi 0, %s142
  $region4: #{branch_block_apply.1} parent=0 // loop_header_branch
    %13 = sbr.rel (%p11) target = $region8
  $region5: #{branch_block_apply.1} parent=0 // loop_body
    %s15 = ssub.s32 %s10, 1
    %s16 = ssub.s32 %s10, 2
    %s23 = sadd.s32 1, %s18
    %p24 = scmp.ge.s32.totalorder %s23, 1
    %s25 = scalar_select %p24, 0, %s23
    %s26 = sadd.s32 1, %s17
    %s27 = scalar_select %p24, %s26, %s17
    %p28 = scmp.ge.s32.totalorder %s27, 2
    %s29 = scalar_select %p28, 0, %s27
    %s30 = ssub.s32 %s17, %s29
    %p31 = scmp.eq.s32.totalorder %s30, 0
    %s33 = sadd.s32 %s32, 1
    %s34 = scalar_select %p31, %s32, %s33
    %p37 = pneg %p31
    %p38 = scmp.eq.s32.totalorder %s10, 1
    %p39 = por %p37, %p38
    %p40 = scmp.ne.s32.totalorder %s32, %s35
    %p41 = scmp.eq.s32.totalorder %s10, 0
    %p42 = por %p40, %p41
    %p43 = scmp.ne.s32.totalorder %s32, %s35
    %p44 = scmp.eq.s32.totalorder %s15, 1
    %p45 = por %p43, %p44
    %p46 = scmp.ne.s32.totalorder %s35, %s36
    %p47 = scmp.eq.s32.totalorder %s15, 0
    %p48 = por %p46, %p47
    %p49 = scmp.ne.s32.totalorder %s35, %s36
    %p50 = scmp.eq.s32.totalorder %s16, 1
    %p51 = por %p49, %p50
    %p53 = scmp.ne.s32.totalorder %s36, %s52
    %p54 = scmp.eq.s32.totalorder %s16, 0
    %p55 = por %p53, %p54
    %s56 = ssub.s32 %s18, %s25
    %p57 = scmp.eq.s32.totalorder %s56, 0
    %s59 = sadd.s32 %s58, 1
    %s60 = scalar_select %p57, %s58, %s59
    %p63 = pneg %p57
    %p64 = scmp.eq.s32.totalorder %s10, 1
    %p65 = por %p63, %p64
    %p66 = scmp.ne.s32.totalorder %s58, %s61
    %p67 = scmp.eq.s32.totalorder %s10, 0
    %p68 = por %p66, %p67
    %p69 = scmp.ne.s32.totalorder %s58, %s61
    %p70 = scmp.eq.s32.totalorder %s15, 1
    %p71 = por %p69, %p70
    %p72 = scmp.ne.s32.totalorder %s61, %s62
    %p73 = scmp.eq.s32.totalorder %s15, 0
    %p74 = por %p72, %p73
    %p75 = scmp.ne.s32.totalorder %s61, %s62
    %p76 = scmp.eq.s32.totalorder %s16, 1
    %p77 = por %p75, %p76
    %p79 = scmp.ne.s32.totalorder %s62, %s78
    %p80 = scmp.eq.s32.totalorder %s16, 0
    %p81 = por %p79, %p80
    %s82 = ssub.s32 %s18, %s25
    %p83 = scmp.eq.s32.totalorder %s82, 0
    %s85 = sadd.s32 %s84, 1
    %s86 = scalar_select %p83, %s84, %s85
    %p89 = pneg %p83
    %p90 = scmp.eq.s32.totalorder %s10, 1
    %p91 = por %p89, %p90
    %p92 = scmp.ne.s32.totalorder %s84, %s87
    %p93 = scmp.eq.s32.totalorder %s10, 0
    %p94 = por %p92, %p93
    %p95 = scmp.ne.s32.totalorder %s84, %s87
    %p96 = scmp.eq.s32.totalorder %s15, 1
    %p97 = por %p95, %p96
    %p98 = scmp.ne.s32.totalorder %s87, %s88
    %p99 = scmp.eq.s32.totalorder %s15, 0
    %p100 = por %p98, %p99
    %p101 = scmp.ne.s32.totalorder %s87, %s88
    %p102 = scmp.eq.s32.totalorder %s16, 1
    %p103 = por %p101, %p102
    %p105 = scmp.ne.s32.totalorder %s88, %s104
    %p106 = scmp.eq.s32.totalorder %s16, 0
    %p107 = por %p105, %p106
    %s108 = ssub.s32 %s18, %s25
    %p109 = scmp.eq.s32.totalorder %s108, 0
    %s111 = sadd.s32 %s110, 1
    %s112 = scalar_select %p109, %s110, %s111
    %p115 = pneg %p109
    %p116 = scmp.eq.s32.totalorder %s10, 1
    %p117 = por %p115, %p116
    %p118 = scmp.ne.s32.totalorder %s110, %s113
    %p119 = scmp.eq.s32.totalorder %s10, 0
    %p120 = por %p118, %p119
    %p121 = scmp.ne.s32.totalorder %s110, %s113
    %p122 = scmp.eq.s32.totalorder %s15, 1
    %p123 = por %p121, %p122
    %p124 = scmp.ne.s32.totalorder %s113, %s114
    %p125 = scmp.eq.s32.totalorder %s15, 0
    %p126 = por %p124, %p125
    %p127 = scmp.ne.s32.totalorder %s113, %s114
    %p128 = scmp.eq.s32.totalorder %s16, 1
    %p129 = por %p127, %p128
    %p131 = scmp.ne.s32.totalorder %s114, %s130
    %p132 = scmp.eq.s32.totalorder %s16, 0
    %p133 = por %p131, %p132
    %s134 = ssub.s32 %s17, %s29
    %s135 = ssub.s32 %s18, %s25
    %s136 = sor.u32 %s134, %s135
    %p137 = scmp.eq.s32.totalorder %s136, 0
    %s139 = sadd.s32 %s138, 1
    %s140 = scalar_select %p137, %s138, %s139
    %p143 = pneg %p137
    %p144 = scmp.eq.s32.totalorder %s10, 1
    %p145 = por %p143, %p144
    %p146 = scmp.ne.s32.totalorder %s138, %s141
    %p147 = scmp.eq.s32.totalorder %s10, 0
    %p148 = por %p146, %p147
    %p149 = scmp.ne.s32.totalorder %s138, %s141
    %p150 = scmp.eq.s32.totalorder %s15, 1
    %p151 = por %p149, %p150
    %p152 = scmp.ne.s32.totalorder %s141, %s142
    %p153 = scmp.eq.s32.totalorder %s15, 0
    %p154 = por %p152, %p153
    %p155 = scmp.ne.s32.totalorder %s141, %s142
    %p156 = scmp.eq.s32.totalorder %s16, 1
    %p157 = por %p155, %p156
    %p159 = scmp.ne.s32.totalorder %s142, %s158
    %p160 = scmp.eq.s32.totalorder %s16, 0
    %p161 = por %p159, %p160
    %p162 = scmp.le.s32.totalorder 1, %s10
    %p163 = scmp.lt.s32.totalorder %s10, 3
    %p164 = pnand %p162, %p163
    %p165 = pneg %p164
    // Predicated region
    $region9: #{branch_block_apply.1} parent=5 // pred_check
      _
    $region10: #{branch_block_apply.1} parent=5 // pred_check_branch
      %167 = sbr.rel (%p164) target = $region12
    $region11: #{branch_block_apply.1} parent=5 // pred_region
      %s168 = ssub.s32 %s10, 1
      // Predicated region
      $region13: #{branch_block_apply.1} parent=11 // pred_check
        %p169 = pneg %p74
      $region14: #{branch_block_apply.1} parent=11 // pred_check_branch
        %171 = sbr.rel (%p169) target = $region16
      $region15: #{branch_block_apply.1} parent=11 // pred_region
        %s172 = smul.u32 2, %s20
        %p173 = scmp.lt.s32.totalorder %s172, 1
        %s174 = scalar_select %p173, %s172, 1
        %s175 = smul.addr %s174, 8
        %s176 = scalar_lea.vmem %s1, %s175
        %s177 = smul.u32 2, %s20
      $region16: #{branch_block_apply.1} parent=11 // pred_fallthru
        _
      // Predicated region
      $region17: #{branch_block_apply.1} parent=11 // pred_check
        %p178 = pneg %p100
      $region18: #{branch_block_apply.1} parent=11 // pred_check_branch
        %180 = sbr.rel (%p178) target = $region20
      $region19: #{branch_block_apply.1} parent=11 // pred_region
        %s181 = smul.u32 2, %s20
        %p182 = scmp.lt.s32.totalorder %s181, 1
        %s183 = scalar_select %p182, %s181, 1
        %s184 = smul.addr %s183, 8
        %s185 = scalar_lea.vmem %s2, %s184
        %s186 = smul.u32 2, %s20
      $region20: #{branch_block_apply.1} parent=11 // pred_fallthru
        _
      // Predicated region
      $region21: #{branch_block_apply.1} parent=11 // pred_check
        %p187 = pneg %p126
      $region22: #{branch_block_apply.1} parent=11 // pred_check_branch
        %189 = sbr.rel (%p187) target = $region24
      $region23: #{branch_block_apply.1} parent=11 // pred_region
        %s190 = smul.u32 2, %s20
        %p191 = scmp.lt.s32.totalorder %s190, 1
        %s192 = scalar_select %p191, %s190, 1
        %s193 = smul.addr %s192, 8
        %s194 = scalar_lea.vmem %s3, %s193
        %s195 = smul.u32 2, %s20
      $region24: #{branch_block_apply.1} parent=11 // pred_fallthru
        _
    $region12: #{branch_block_apply.1} parent=5 // pred_fallthru
      _
    %p196 = scmp.lt.s32.totalorder %s10, 2
    // Predicated region
    $region25: #{branch_block_apply.1} parent=5 // pred_check
      %p197 = pneg %p196
    $region26: #{branch_block_apply.1} parent=5 // pred_check_branch
      %199 = sbr.rel (%p197) target = $region28
    $region27: #{branch_block_apply.1} parent=5 // pred_region
      // Predicated region
      $region29: #{branch_block_apply.1} parent=27 // pred_check
        %p200 = pneg %p42
      $region30: #{branch_block_apply.1} parent=27 // pred_check_branch
        %202 = sbr.rel (%p200) target = $region32
      $region31: #{branch_block_apply.1} parent=27 // pred_region
        %p203 = scmp.lt.s32.totalorder %s17, 1
        %s204 = scalar_select %p203, %s17, 1
        %s205 = smul.addr %s204, 4
        %s206 = smul.addr %s205, 4
        %s207 = scalar_lea.vmem %s0, %s206
      $region32: #{branch_block_apply.1} parent=27 // pred_fallthru
        _
    $region28: #{branch_block_apply.1} parent=5 // pred_fallthru
      _
    %p208 = scmp.le.s32.totalorder 1, %s10
    %p209 = scmp.lt.s32.totalorder %s10, 3
    %p210 = pnand %p208, %p209
    %p211 = pneg %p210
    // Predicated region
    $region33: #{branch_block_apply.1} parent=5 // pred_check
      _
    $region34: #{branch_block_apply.1} parent=5 // pred_check_branch
      %213 = sbr.rel (%p210) target = $region36
    $region35: #{branch_block_apply.1} parent=5 // pred_region
      %s214 = ssub.s32 %s10, 1
      %p215 = scmp.lt.s32.totalorder %s19, 1
      %s216 = scalar_select %p215, %s19, 1
      %s217 = smul.addr %s216, 4
      %s218 = smul.addr %s217, 4
      %s219 = scalar_lea.vmem %s0, %s218
      %p220 = pneg %p48
      %p221 = pneg %p45
      %s222 = smul.u32 2, %s20
      %p223 = scmp.lt.s32.totalorder %s222, 1
      %s224 = scalar_select %p223, %s222, 1
      %s225 = smul.addr %s224, 8
      %s226 = scalar_lea.vmem %s1, %s225
      %p227 = pneg %p74
      %p228 = pneg %p71
      %s229 = smul.u32 2, %s20
      %p230 = scmp.lt.s32.totalorder %s229, 1
      %s231 = scalar_select %p230, %s229, 1
      %s232 = smul.addr %s231, 8
      %s233 = scalar_lea.vmem %s2, %s232
      %p234 = pneg %p100
      %p235 = pneg %p97
      %s236 = smul.u32 2, %s20
      %p237 = scmp.lt.s32.totalorder %s236, 1
      %s238 = scalar_select %p237, %s236, 1
      %s239 = smul.addr %s238, 8
      %s240 = scalar_lea.vmem %s3, %s239
      %p241 = pneg %p126
      %p242 = pneg %p123
      %p243 = pneg %p154
      %p244 = pneg %p151
      %s245 = smul.u32 2, %s20
      %p246 = scmp.lt.s32.totalorder %s19, 1
      %s247 = scalar_select %p246, %s19, 1
      %p248 = scmp.lt.s32.totalorder %s245, 1
      %s249 = scalar_select %p248, %s245, 1
      %s250 = smul.addr %s249, 3
      %s251 = smul.addr %s247, 6
      %s252 = sadd.s32 %s250, %s251
      %s253 = smul.addr %s252, 8
      %s254 = scalar_lea.vmem %s4, %s253
      %p255 = scmp.lt.s32.totalorder %s19, 1
      %s256 = scalar_select %p255, %s19, 1
      %s257 = smul.addr %s256, 4
      %s258 = smul.addr %s257, 4
      %s259 = scalar_lea.vmem %s0, %s258
      %s260 = smul.u32 2, %s20
      %p261 = scmp.lt.s32.totalorder %s260, 1
      %s262 = scalar_select %p261, %s260, 1
      %s263 = smul.addr %s262, 8
      %s264 = scalar_lea.vmem %s1, %s263
      %s265 = smul.u32 2, %s20
      %s266 = smul.u32 2, %s20
      %p267 = scmp.lt.s32.totalorder %s266, 1
      %s268 = scalar_select %p267, %s266, 1
      %s269 = smul.addr %s268, 8
      %s270 = scalar_lea.vmem %s2, %s269
      %s271 = smul.u32 2, %s20
      %s272 = smul.u32 2, %s20
      %p273 = scmp.lt.s32.totalorder %s272, 1
      %s274 = scalar_select %p273, %s272, 1
      %s275 = smul.addr %s274, 8
      %s276 = scalar_lea.vmem %s3, %s275
      %s277 = smul.u32 2, %s20
      %s278 = smul.u32 2, %s20
      %p279 = scmp.lt.s32.totalorder %s19, 1
      %s280 = scalar_select %p279, %s19, 1
      %p281 = scmp.lt.s32.totalorder %s278, 1
      %s282 = scalar_select %p281, %s278, 1
      %s283 = smul.addr %s282, 3
      %s284 = smul.addr %s280, 6
      %s285 = sadd.s32 %s283, %s284
      %s286 = smul.addr %s285, 8
      %s287 = scalar_lea.vmem %s4, %s286
      %s288 = smul.u32 2, %s20
      %v289 = vld [vmem:[%s259] sm:$0xff]
      %v290 = vld [vmem:[%s259 + $0x8] sm:$0xf]
      %v291 = vld [vmem:[%s259 + $0x8] sm:$0xff]
      %v293 = vcombine.high %v289, %v289
      %v296 = vcombine.low %v289, %v289
      %v297 = vcombine.low %v291, %v291
      %298 = vrot.lane.b32.xlu0 %v296, 127
      %v299 = vpop.permute.xlu0 %298
      %300 = vrot.lane.b32.xlu0 %v289, 127
      %v301 = vpop.permute.xlu0 %300
      %302 = vrot.lane.b32.xlu0 %v297, 127
      %v303 = vpop.permute.xlu0 %302
      %304 = vrot.lane.b32.xlu0 %v291, 127
      %v305 = vpop.permute.xlu0 %304
      %vm306 = vcmask 1039360
      %v307 = vsel %vm306, %v299, %v301
      %v308 = vsel %vm306, %v301, %v303
      %v309 = vsel %vm306, %v303, %v305
      %v313 = vcombine.high %v291, %v291
      %314 = vrot.lane.b32.xlu0 %v289, 126
      %v315 = vpop.permute.xlu0 %314
      %316 = vrot.lane.b32.xlu0 %v293, 126
      %v317 = vpop.permute.xlu0 %316
      %318 = vrot.lane.b32.xlu0 %v291, 126
      %v319 = vpop.permute.xlu0 %318
      %320 = vrot.lane.b32.xlu0 %v313, 126
      %v321 = vpop.permute.xlu0 %320
      %vm322 = vcmask 1031168
      %v323 = vsel %vm322, %v315, %v317
      %v324 = vsel %vm322, %v317, %v319
      %v325 = vsel %vm322, %v319, %v321
      %329 = vrot.lane.b32.xlu0 %v296, 110
      %v330 = vpop.permute.xlu0 %329
      %331 = vrot.lane.b32.xlu0 %v289, 110
      %v332 = vpop.permute.xlu0 %331
      %333 = vrot.lane.b32.xlu0 %v297, 110
      %v334 = vpop.permute.xlu0 %333
      %335 = vrot.lane.b32.xlu0 %v291, 110
      %v336 = vpop.permute.xlu0 %335
      %vm337 = vcmask 900096
      %v338 = vsel %vm337, %v330, %v332
      %v339 = vsel %vm337, %v332, %v334
      %v340 = vsel %vm337, %v334, %v336
      %344 = vrot.lane.b32.xlu0 %v289, 109
      %v345 = vpop.permute.xlu0 %344
      %346 = vrot.lane.b32.xlu0 %v293, 109
      %v347 = vpop.permute.xlu0 %346
      %348 = vrot.lane.b32.xlu0 %v291, 109
      %v349 = vpop.permute.xlu0 %348
      %350 = vrot.lane.b32.xlu0 %v313, 109
      %v351 = vpop.permute.xlu0 %350
      %vm352 = vcmask 891904
      %v353 = vsel %vm352, %v345, %v347
      %v354 = vsel %vm352, %v347, %v349
      %v355 = vsel %vm352, %v349, %v351
      %359 = vrot.lane.b32.xlu0 %v296, 108
      %v360 = vpop.permute.xlu0 %359
      %361 = vrot.lane.b32.xlu0 %v289, 108
      %v362 = vpop.permute.xlu0 %361
      %363 = vrot.lane.b32.xlu0 %v297, 108
      %v364 = vpop.permute.xlu0 %363
      %365 = vrot.lane.b32.xlu0 %v291, 108
      %v366 = vpop.permute.xlu0 %365
      %vm367 = vcmask 883712
      %v368 = vsel %vm367, %v360, %v362
      %v369 = vsel %vm367, %v362, %v364
      %v370 = vsel %vm367, %v364, %v366
      %374 = vrot.lane.b32.xlu0 %v289, 92
      %v375 = vpop.permute.xlu0 %374
      %376 = vrot.lane.b32.xlu0 %v293, 92
      %v377 = vpop.permute.xlu0 %376
      %378 = vrot.lane.b32.xlu0 %v291, 92
      %v379 = vpop.permute.xlu0 %378
      %380 = vrot.lane.b32.xlu0 %v313, 92
      %v381 = vpop.permute.xlu0 %380
      %vm382 = vcmask 752640
      %v383 = vsel %vm382, %v375, %v377
      %v384 = vsel %vm382, %v377, %v379
      %v385 = vsel %vm382, %v379, %v381
      %389 = vrot.lane.b32.xlu0 %v296, 91
      %v390 = vpop.permute.xlu0 %389
      %391 = vrot.lane.b32.xlu0 %v289, 91
      %v392 = vpop.permute.xlu0 %391
      %393 = vrot.lane.b32.xlu0 %v297, 91
      %v394 = vpop.permute.xlu0 %393
      %395 = vrot.lane.b32.xlu0 %v291, 91
      %v396 = vpop.permute.xlu0 %395
      %vm397 = vcmask 744448
      %v398 = vsel %vm397, %v390, %v392
      %v399 = vsel %vm397, %v392, %v394
      %v400 = vsel %vm397, %v394, %v396
      %404 = vrot.lane.b32.xlu0 %v289, 90
      %v405 = vpop.permute.xlu0 %404
      %406 = vrot.lane.b32.xlu0 %v293, 90
      %v407 = vpop.permute.xlu0 %406
      %408 = vrot.lane.b32.xlu0 %v291, 90
      %v409 = vpop.permute.xlu0 %408
      %410 = vrot.lane.b32.xlu0 %v313, 90
      %v411 = vpop.permute.xlu0 %410
      %vm412 = vcmask 736256
      %v413 = vsel %vm412, %v405, %v407
      %v414 = vsel %vm412, %v407, %v409
      %v415 = vsel %vm412, %v409, %v411
      %vm416 = vcmask 1043456
      %v417 = vsel %vm416, %v289, %v307
      %v418 = vsel %vm416, %v293, %v308
      %v419 = vsel %vm416, %v290, %v309
      %v420 = vsel %vm416, %v323, %v338
      %v421 = vsel %vm416, %v324, %v339
      %v422 = vsel %vm416, %v325, %v340
      %v423 = vsel %vm416, %v353, %v368
      %v424 = vsel %vm416, %v354, %v369
      %v425 = vsel %vm416, %v355, %v370
      %v426 = vsel %vm416, %v383, %v398
      %v427 = vsel %vm416, %v384, %v399
      %v428 = vsel %vm416, %v385, %v400
      %v429 = vld [vmem:[%s264] sm:$0xff]
      %v430 = vld [vmem:[%s264 + $0x8] sm:$0xff]
      %vm431 = vcmask 293888
      %v433 = vsel %vm431, %v429, 0
      %v436 = vsel %vm431, %v430, 0
      %v438 = vsel %vm416, %v413, 0
      %v440 = vsel %vm416, %v414, 0
      %v442 = vsel %vm416, %v415, 0
      %444 = vmatprep.subr.mxu0 %v418
      %445 = vmatpush1.msra.mxu0 %v417
      %446 = vmatprep.subr.mxu0 %v421
      %447 = vmatpush1.msra.mxu0 %v420
      %448 = vmatprep.subr.mxu0 %v424
      %449 = vmatpush1.msra.mxu0 %v423
      %450 = vmatprep.subr.mxu0 %v427
      %451 = vmatpush1.msra.mxu0 %v426
      %452 = vmatprep.subr.mxu0 %v440
      %453 = vmatpush1.msra.mxu0 %v438
      %454 = vmatprep.subr.mxu0 0.0
      %455 = vmatpush1.msra.mxu0 0.0
      %456 = vmatprep.subr.mxu0 0.0
      %457 = vmatpush1.msra.mxu0 0.0
      %458 = vmatprep.subr.mxu0 0.0
      %459 = vmatpush1.msra.mxu0 0.0
      %460 = vmatprep.subr.mxu0 0.0
      %461 = vmatpush1.msra.mxu0 0.0
      %462 = vmatprep.subr.mxu0 0.0
      %463 = vmatpush1.msra.mxu0 0.0
      %464 = vmatprep.subr.mxu0 0.0
      %465 = vmatpush1.msra.mxu0 0.0
      %466 = vmatprep.subr.mxu0 0.0
      %467 = vmatpush1.msra.mxu0 0.0
      %468 = vmatprep.subr.mxu0 0.0
      %469 = vmatpush1.msra.mxu0 0.0
      %470 = vmatprep.subr.mxu0 0.0
      %471 = vmatpush1.msra.mxu0 0.0
      %472 = vmatprep.subr.mxu0 0.0
      %473 = vmatpush1.msra.mxu0 0.0
      %474 = vmatprep.subr.mxu0 0.0
      %475 = vmatpush1.msra.mxu0 0.0
      %476 = vmatprep.subr.mxu0 0.0
      %477 = vmatpush1.msra.mxu0 0.0
      %478 = vmatprep.subr.mxu0 0.0
      %479 = vmatpush1.msra.mxu0 0.0
      %480 = vmatprep.subr.mxu0 0.0
      %481 = vmatpush1.msra.mxu0 0.0
      %482 = vmatprep.subr.mxu0 0.0
      %483 = vmatpush1.msra.mxu0 0.0
      %484 = vmatprep.subr.mxu0 0.0
      %485 = vmatpush1.msra.mxu0 0.0
      %486 = vmatprep.subr.mxu0 0.0
      %487 = vmatpush1.msra.mxu0 0.0
      %488 = vmatprep.subr.mxu0 0.0
      %489 = vmatpush1.msra.mxu0 0.0
      %490 = vmatprep.subr.mxu0 0.0
      %491 = vmatpush1.msra.mxu0 0.0
      %492 = vmatprep.subr.mxu0 0.0
      %493 = vmatpush1.msra.mxu0 0.0
      %494 = vmatprep.subr.mxu0 0.0
      %495 = vmatpush1.msra.mxu0 0.0
      %496 = vmatprep.subr.mxu0 0.0
      %497 = vmatpush1.msra.mxu0 0.0
      %498 = vmatprep.subr.mxu0 0.0
      %499 = vmatpush1.msra.mxu0 0.0
      %500 = vmatprep.subr.mxu0 0.0
      %501 = vmatpush1.msra.mxu0 0.0
      %502 = vmatprep.subr.mxu0 0.0
      %503 = vmatpush1.msra.mxu0 0.0
      %504 = vmatprep.subr.mxu0 0.0
      %505 = vmatpush1.msra.mxu0 0.0
      %506 = vmatprep.subr.mxu0 0.0
      %507 = vmatpush1.msra.mxu0 0.0
      %508 = vmatprep.mubr.f32.mxu0 0.0
      %509 = vmatmul.mubr.f32.gmra.mrb[0].mxu0 %v433
      %v510 = vpop.f32.mrb[0].mxu0
      %v511 = vadd.f32 0.0, %v510
      %v512 = vpop.f32.mrb[0].mxu0
      %v513 = vadd.f32 0.0, %v512
      %514 = vmatprep.mubr.f32.mxu0 0.0
      %515 = vmatmul.mubr.f32.gmra.mrb[0].mxu0 %v436
      %v516 = vpop.f32.mrb[0].mxu0
      %v517 = vadd.f32 0.0, %v516
      %v518 = vpop.f32.mrb[0].mxu0
      %v519 = vadd.f32 0.0, %v518
      %520 = vdwg.mxu0
      %521 = vmatprep.subr.mxu0 0.0
      %522 = vmatpush1.msra.mxu0 %v419
      %523 = vmatprep.subr.mxu0 0.0
      %524 = vmatpush1.msra.mxu0 %v422
      %525 = vmatprep.subr.mxu0 0.0
      %526 = vmatpush1.msra.mxu0 %v425
      %527 = vmatprep.subr.mxu0 0.0
      %528 = vmatpush1.msra.mxu0 %v428
      %529 = vmatprep.subr.mxu0 0.0
      %530 = vmatpush1.msra.mxu0 %v442
      %531 = vmatprep.subr.mxu0 0.0
      %532 = vmatpush1.msra.mxu0 0.0
      %533 = vmatprep.subr.mxu0 0.0
      %534 = vmatpush1.msra.mxu0 0.0
      %535 = vmatprep.subr.mxu0 0.0
      %536 = vmatpush1.msra.mxu0 0.0
      %537 = vmatprep.subr.mxu0 0.0
      %538 = vmatpush1.msra.mxu0 0.0
      %539 = vmatprep.subr.mxu0 0.0
      %540 = vmatpush1.msra.mxu0 0.0
      %541 = vmatprep.subr.mxu0 0.0
      %542 = vmatpush1.msra.mxu0 0.0
      %543 = vmatprep.subr.mxu0 0.0
      %544 = vmatpush1.msra.mxu0 0.0
      %545 = vmatprep.subr.mxu0 0.0
      %546 = vmatpush1.msra.mxu0 0.0
      %547 = vmatprep.subr.mxu0 0.0
      %548 = vmatpush1.msra.mxu0 0.0
      %549 = vmatprep.subr.mxu0 0.0
      %550 = vmatpush1.msra.mxu0 0.0
      %551 = vmatprep.subr.mxu0 0.0
      %552 = vmatpush1.msra.mxu0 0.0
      %553 = vmatprep.subr.mxu0 0.0
      %554 = vmatpush1.msra.mxu0 0.0
      %555 = vmatprep.subr.mxu0 0.0
      %556 = vmatpush1.msra.mxu0 0.0
      %557 = vmatprep.subr.mxu0 0.0
      %558 = vmatpush1.msra.mxu0 0.0
      %559 = vmatprep.subr.mxu0 0.0
      %560 = vmatpush1.msra.mxu0 0.0
      %561 = vmatprep.subr.mxu0 0.0
      %562 = vmatpush1.msra.mxu0 0.0
      %563 = vmatprep.subr.mxu0 0.0
      %564 = vmatpush1.msra.mxu0 0.0
      %565 = vmatprep.subr.mxu0 0.0
      %566 = vmatpush1.msra.mxu0 0.0
      %567 = vmatprep.subr.mxu0 0.0
      %568 = vmatpush1.msra.mxu0 0.0
      %569 = vmatprep.subr.mxu0 0.0
      %570 = vmatpush1.msra.mxu0 0.0
      %571 = vmatprep.subr.mxu0 0.0
      %572 = vmatpush1.msra.mxu0 0.0
      %573 = vmatprep.subr.mxu0 0.0
      %574 = vmatpush1.msra.mxu0 0.0
      %575 = vmatprep.subr.mxu0 0.0
      %576 = vmatpush1.msra.mxu0 0.0
      %577 = vmatprep.subr.mxu0 0.0
      %578 = vmatpush1.msra.mxu0 0.0
      %579 = vmatprep.subr.mxu0 0.0
      %580 = vmatpush1.msra.mxu0 0.0
      %581 = vmatprep.subr.mxu0 0.0
      %582 = vmatpush1.msra.mxu0 0.0
      %583 = vmatprep.subr.mxu0 0.0
      %584 = vmatpush1.msra.mxu0 0.0
      %585 = vmatprep.mubr.f32.mxu0 0.0
      %586 = vmatmul.mubr.f32.gmra.mrb[0].mxu0 %v433
      %v587 = vpop.f32.mrb[0].mxu0
      %v588 = vadd.f32 0.0, %v587
      %v589 = vpop.f32.mrb[0].mxu0
      %590 = vmatprep.mubr.f32.mxu0 0.0
      %591 = vmatmul.mubr.f32.gmra.mrb[0].mxu0 %v436
      %v592 = vpop.f32.mrb[0].mxu0
      %v593 = vadd.f32 0.0, %v592
      %v594 = vpop.f32.mrb[0].mxu0
      %595 = vdwg.mxu0
      %v596 = vlaneseq
      %v597 = vshrl.u32 %v596, 7
      %v598 = vadd.s32 %v597, 8
      %v599 = vadd.s32 %v597, 16
      %v600 = vadd.s32 %v597, 24
      %v601 = vadd.s32 %v597, 32
      %v602 = vadd.s32 %v597, 40
      %v603 = vadd.s32 %v597, 48
      %v604 = vadd.s32 %v597, 56
      %v605 = vadd.s32 %v597, 64
      %v606 = vadd.s32 %v597, 72
      %v607 = vadd.s32 %v597, 80
      %v608 = vadd.s32 %v597, 88
      %v609 = vadd.s32 %v597, 96
      %v610 = vadd.s32 %v597, 104
      %v611 = vadd.s32 %v597, 112
      %v612 = vadd.s32 %v597, 120
      %v613 = vadd.s32 %v597, 128
      %v614 = vadd.s32 %v597, 136
      %v615 = vadd.s32 %v597, 144
      %v616 = vadd.s32 %v597, 152
      %v617 = vadd.s32 %v597, 160
      %v618 = vadd.s32 %v597, 168
      %v619 = vadd.s32 %v597, 176
      %v620 = vadd.s32 %v597, 184
      %v621 = vadd.s32 %v597, 192
      %v622 = vadd.s32 %v597, 200
      %v623 = vadd.s32 %v597, 208
      %v624 = vadd.s32 %v597, 216
      %v625 = vadd.s32 %v597, 224
      %v626 = vadd.s32 %v597, 232
      %v627 = vadd.s32 %v597, 240
      %v628 = vadd.s32 %v597, 248
      %v629 = vadd.s32 %v597, 256
      %v630 = vadd.s32 %v597, 264
      %v631 = vadd.s32 %v597, 272
      %v632 = vadd.s32 %v597, 280
      %v633 = vadd.s32 %v597, 288
      %v634 = vadd.s32 %v597, 296
      %v635 = vadd.s32 %v597, 304
      %v636 = vadd.s32 %v597, 312
      %v637 = vadd.s32 %v597, 320
      %v638 = vadd.s32 %v597, 328
      %v639 = vadd.s32 %v597, 336
      %v640 = vadd.s32 %v597, 344
      %v641 = vadd.s32 %v597, 352
      %v642 = vadd.s32 %v597, 360
      %v643 = vadd.s32 %v597, 368
      %v644 = vadd.s32 %v597, 376
      %vm645 = vcmp.lt.s32.totalorder %v597, 288
      %vm646 = vcmp.lt.s32.totalorder %v598, 288
      %vm647 = vcmp.lt.s32.totalorder %v599, 288
      %vm648 = vcmp.lt.s32.totalorder %v600, 288
      %vm649 = vcmp.lt.s32.totalorder %v601, 288
      %vm650 = vcmp.lt.s32.totalorder %v602, 288
      %vm651 = vcmp.lt.s32.totalorder %v603, 288
      %vm652 = vcmp.lt.s32.totalorder %v604, 288
      %vm653 = vcmp.lt.s32.totalorder %v605, 288
      %vm654 = vcmp.lt.s32.totalorder %v606, 288
      %vm655 = vcmp.lt.s32.totalorder %v607, 288
      %vm656 = vcmp.lt.s32.totalorder %v608, 288
      %vm657 = vcmp.lt.s32.totalorder %v609, 288
      %vm658 = vcmp.lt.s32.totalorder %v610, 288
      %vm659 = vcmp.lt.s32.totalorder %v611, 288
      %vm660 = vcmp.lt.s32.totalorder %v612, 288
      %vm661 = vcmp.lt.s32.totalorder %v613, 288
      %vm662 = vcmp.lt.s32.totalorder %v614, 288
      %vm663 = vcmp.lt.s32.totalorder %v615, 288
      %vm664 = vcmp.lt.s32.totalorder %v616, 288
      %vm665 = vcmp.lt.s32.totalorder %v617, 288
      %vm666 = vcmp.lt.s32.totalorder %v618, 288
      %vm667 = vcmp.lt.s32.totalorder %v619, 288
      %vm668 = vcmp.lt.s32.totalorder %v620, 288
      %vm669 = vcmp.lt.s32.totalorder %v621, 288
      %vm670 = vcmp.lt.s32.totalorder %v622, 288
      %vm671 = vcmp.lt.s32.totalorder %v623, 288
      %vm672 = vcmp.lt.s32.totalorder %v624, 288
      %vm673 = vcmp.lt.s32.totalorder %v625, 288
      %vm674 = vcmp.lt.s32.totalorder %v626, 288
      %vm675 = vcmp.lt.s32.totalorder %v627, 288
      %vm676 = vcmp.lt.s32.totalorder %v628, 288
      %vm677 = vcmp.lt.s32.totalorder %v629, 288
      %vm678 = vcmp.lt.s32.totalorder %v630, 288
      %vm679 = vcmp.lt.s32.totalorder %v631, 288
      %vm680 = vcmp.lt.s32.totalorder %v632, 288
      %vm681 = vcmp.lt.s32.totalorder %v633, 288
      %vm682 = vcmp.lt.s32.totalorder %v634, 288
      %vm683 = vcmp.lt.s32.totalorder %v635, 288
      %vm684 = vcmp.lt.s32.totalorder %v636, 288
      %vm685 = vcmp.lt.s32.totalorder %v637, 288
      %vm686 = vcmp.lt.s32.totalorder %v638, 288
      %vm687 = vcmp.lt.s32.totalorder %v639, 288
      %vm688 = vcmp.lt.s32.totalorder %v640, 288
      %vm689 = vcmp.lt.s32.totalorder %v641, 288
      %vm690 = vcmp.lt.s32.totalorder %v642, 288
      %vm691 = vcmp.lt.s32.totalorder %v643, 288
      %vm692 = vcmp.lt.s32.totalorder %v644, 288
      %vm693 = vcmp.lt.s32.totalorder %v597, 0
      %v694 = vsub.s32 0, %v597
      %v695 = vsel %vm693, %v694, %v597
      %v696 = vmul.u32.u64.compose %v695, 3817748708
      %v697 = vextract.low.u32 %v696
      %v698 = vextract.high.u32 %v696
      %v699 = vshrl.u32 %v698, 4
      %v700 = vmul.u32 %v699, 18
      %v701 = vsub.s32 %v695, %v700
      %v702 = vsub.s32 0, %v701
      %v703 = vsel %vm693, %v702, %v701
      %vm704 = vcmp.lt.s32.totalorder %v598, 0
      %v705 = vsub.s32 0, %v598
      %v706 = vsel %vm704, %v705, %v598
      %v707 = vmul.u32.u64.compose %v706, 3817748708
      %v708 = vextract.low.u32 %v707
      %v709 = vextract.high.u32 %v707
      %v710 = vshrl.u32 %v709, 4
      %v711 = vmul.u32 %v710, 18
      %v712 = vsub.s32 %v706, %v711
      %v713 = vsub.s32 0, %v712
      %v714 = vsel %vm704, %v713, %v712
      %vm715 = vcmp.lt.s32.totalorder %v599, 0
      %v716 = vsub.s32 0, %v599
      %v717 = vsel %vm715, %v716, %v599
      %v718 = vmul.u32.u64.compose %v717, 3817748708
      %v719 = vextract.low.u32 %v718
      %v720 = vextract.high.u32 %v718
      %v721 = vshrl.u32 %v720, 4
      %v722 = vmul.u32 %v721, 18
      %v723 = vsub.s32 %v717, %v722
      %v724 = vsub.s32 0, %v723
      %v725 = vsel %vm715, %v724, %v723
      %vm726 = vcmp.lt.s32.totalorder %v600, 0
      %v727 = vsub.s32 0, %v600
      %v728 = vsel %vm726, %v727, %v600
      %v729 = vmul.u32.u64.compose %v728, 3817748708
      %v730 = vextract.low.u32 %v729
      %v731 = vextract.high.u32 %v729
      %v732 = vshrl.u32 %v731, 4
      %v733 = vmul.u32 %v732, 18
      %v734 = vsub.s32 %v728, %v733
      %v735 = vsub.s32 0, %v734
      %v736 = vsel %vm726, %v735, %v734
      %vm737 = vcmp.lt.s32.totalorder %v601, 0
      %v738 = vsub.s32 0, %v601
      %v739 = vsel %vm737, %v738, %v601
      %v740 = vmul.u32.u64.compose %v739, 3817748708
      %v741 = vextract.low.u32 %v740
      %v742 = vextract.high.u32 %v740
      %v743 = vshrl.u32 %v742, 4
      %v744 = vmul.u32 %v743, 18
      %v745 = vsub.s32 %v739, %v744
      %v746 = vsub.s32 0, %v745
      %v747 = vsel %vm737, %v746, %v745
      %vm748 = vcmp.lt.s32.totalorder %v602, 0
      %v749 = vsub.s32 0, %v602
      %v750 = vsel %vm748, %v749, %v602
      %v751 = vmul.u32.u64.compose %v750, 3817748708
      %v752 = vextract.low.u32 %v751
      %v753 = vextract.high.u32 %v751
      %v754 = vshrl.u32 %v753, 4
      %v755 = vmul.u32 %v754, 18
      %v756 = vsub.s32 %v750, %v755
      %v757 = vsub.s32 0, %v756
      %v758 = vsel %vm748, %v757, %v756
      %vm759 = vcmp.lt.s32.totalorder %v603, 0
      %v760 = vsub.s32 0, %v603
      %v761 = vsel %vm759, %v760, %v603
      %v762 = vmul.u32.u64.compose %v761, 3817748708
      %v763 = vextract.low.u32 %v762
      %v764 = vextract.high.u32 %v762
      %v765 = vshrl.u32 %v764, 4
      %v766 = vmul.u32 %v765, 18
      %v767 = vsub.s32 %v761, %v766
      %v768 = vsub.s32 0, %v767
      %v769 = vsel %vm759, %v768, %v767
      %vm770 = vcmp.lt.s32.totalorder %v604, 0
      %v771 = vsub.s32 0, %v604
      %v772 = vsel %vm770, %v771, %v604
      %v773 = vmul.u32.u64.compose %v772, 3817748708
      %v774 = vextract.low.u32 %v773
      %v775 = vextract.high.u32 %v773
      %v776 = vshrl.u32 %v775, 4
      %v777 = vmul.u32 %v776, 18
      %v778 = vsub.s32 %v772, %v777
      %v779 = vsub.s32 0, %v778
      %v780 = vsel %vm770, %v779, %v778
      %vm781 = vcmp.lt.s32.totalorder %v605, 0
      %v782 = vsub.s32 0, %v605
      %v783 = vsel %vm781, %v782, %v605
      %v784 = vmul.u32.u64.compose %v783, 3817748708
      %v785 = vextract.low.u32 %v784
      %v786 = vextract.high.u32 %v784
      %v787 = vshrl.u32 %v786, 4
      %v788 = vmul.u32 %v787, 18
      %v789 = vsub.s32 %v783, %v788
      %v790 = vsub.s32 0, %v789
      %v791 = vsel %vm781, %v790, %v789
      %vm792 = vcmp.lt.s32.totalorder %v606, 0
      %v793 = vsub.s32 0, %v606
      %v794 = vsel %vm792, %v793, %v606
      %v795 = vmul.u32.u64.compose %v794, 3817748708
      %v796 = vextract.low.u32 %v795
      %v797 = vextract.high.u32 %v795
      %v798 = vshrl.u32 %v797, 4
      %v799 = vmul.u32 %v798, 18
      %v800 = vsub.s32 %v794, %v799
      %v801 = vsub.s32 0, %v800
      %v802 = vsel %vm792, %v801, %v800
      %vm803 = vcmp.lt.s32.totalorder %v607, 0
      %v804 = vsub.s32 0, %v607
      %v805 = vsel %vm803, %v804, %v607
      %v806 = vmul.u32.u64.compose %v805, 3817748708
      %v807 = vextract.low.u32 %v806
      %v808 = vextract.high.u32 %v806
      %v809 = vshrl.u32 %v808, 4
      %v810 = vmul.u32 %v809, 18
      %v811 = vsub.s32 %v805, %v810
      %v812 = vsub.s32 0, %v811
      %v813 = vsel %vm803, %v812, %v811
      %vm814 = vcmp.lt.s32.totalorder %v608, 0
      %v815 = vsub.s32 0, %v608
      %v816 = vsel %vm814, %v815, %v608
      %v817 = vmul.u32.u64.compose %v816, 3817748708
      %v818 = vextract.low.u32 %v817
      %v819 = vextract.high.u32 %v817
      %v820 = vshrl.u32 %v819, 4
      %v821 = vmul.u32 %v820, 18
      %v822 = vsub.s32 %v816, %v821
      %v823 = vsub.s32 0, %v822
      %v824 = vsel %vm814, %v823, %v822
      %vm825 = vcmp.lt.s32.totalorder %v609, 0
      %v826 = vsub.s32 0, %v609
      %v827 = vsel %vm825, %v826, %v609
      %v828 = vmul.u32.u64.compose %v827, 3817748708
      %v829 = vextract.low.u32 %v828
      %v830 = vextract.high.u32 %v828
      %v831 = vshrl.u32 %v830, 4
      %v832 = vmul.u32 %v831, 18
      %v833 = vsub.s32 %v827, %v832
      %v834 = vsub.s32 0, %v833
      %v835 = vsel %vm825, %v834, %v833
      %vm836 = vcmp.lt.s32.totalorder %v610, 0
      %v837 = vsub.s32 0, %v610
      %v838 = vsel %vm836, %v837, %v610
      %v839 = vmul.u32.u64.compose %v838, 3817748708
      %v840 = vextract.low.u32 %v839
      %v841 = vextract.high.u32 %v839
      %v842 = vshrl.u32 %v841, 4
      %v843 = vmul.u32 %v842, 18
      %v844 = vsub.s32 %v838, %v843
      %v845 = vsub.s32 0, %v844
      %v846 = vsel %vm836, %v845, %v844
      %vm847 = vcmp.lt.s32.totalorder %v611, 0
      %v848 = vsub.s32 0, %v611
      %v849 = vsel %vm847, %v848, %v611
      %v850 = vmul.u32.u64.compose %v849, 3817748708
      %v851 = vextract.low.u32 %v850
      %v852 = vextract.high.u32 %v850
      %v853 = vshrl.u32 %v852, 4
      %v854 = vmul.u32 %v853, 18
      %v855 = vsub.s32 %v849, %v854
      %v856 = vsub.s32 0, %v855
      %v857 = vsel %vm847, %v856, %v855
      %vm858 = vcmp.lt.s32.totalorder %v612, 0
      %v859 = vsub.s32 0, %v612
      %v860 = vsel %vm858, %v859, %v612
      %v861 = vmul.u32.u64.compose %v860, 3817748708
      %v862 = vextract.low.u32 %v861
      %v863 = vextract.high.u32 %v861
      %v864 = vshrl.u32 %v863, 4
      %v865 = vmul.u32 %v864, 18
      %v866 = vsub.s32 %v860, %v865
      %v867 = vsub.s32 0, %v866
      %v868 = vsel %vm858, %v867, %v866
      %vm869 = vcmp.lt.s32.totalorder %v613, 0
      %v870 = vsub.s32 0, %v613
      %v871 = vsel %vm869, %v870, %v613
      %v872 = vmul.u32.u64.compose %v871, 3817748708
      %v873 = vextract.low.u32 %v872
      %v874 = vextract.high.u32 %v872
      %v875 = vshrl.u32 %v874, 4
      %v876 = vmul.u32 %v875, 18
      %v877 = vsub.s32 %v871, %v876
      %v878 = vsub.s32 0, %v877
      %v879 = vsel %vm869, %v878, %v877
      %vm880 = vcmp.lt.s32.totalorder %v614, 0
      %v881 = vsub.s32 0, %v614
      %v882 = vsel %vm880, %v881, %v614
      %v883 = vmul.u32.u64.compose %v882, 3817748708
      %v884 = vextract.low.u32 %v883
      %v885 = vextract.high.u32 %v883
      %v886 = vshrl.u32 %v885, 4
      %v887 = vmul.u32 %v886, 18
      %v888 = vsub.s32 %v882, %v887
      %v889 = vsub.s32 0, %v888
      %v890 = vsel %vm880, %v889, %v888
      %vm891 = vcmp.lt.s32.totalorder %v615, 0
      %v892 = vsub.s32 0, %v615
      %v893 = vsel %vm891, %v892, %v615
      %v894 = vmul.u32.u64.compose %v893, 3817748708
      %v895 = vextract.low.u32 %v894
      %v896 = vextract.high.u32 %v894
      %v897 = vshrl.u32 %v896, 4
      %v898 = vmul.u32 %v897, 18
      %v899 = vsub.s32 %v893, %v898
      %v900 = vsub.s32 0, %v899
      %v901 = vsel %vm891, %v900, %v899
      %vm902 = vcmp.lt.s32.totalorder %v616, 0
      %v903 = vsub.s32 0, %v616
      %v904 = vsel %vm902, %v903, %v616
      %v905 = vmul.u32.u64.compose %v904, 3817748708
      %v906 = vextract.low.u32 %v905
      %v907 = vextract.high.u32 %v905
      %v908 = vshrl.u32 %v907, 4
      %v909 = vmul.u32 %v908, 18
      %v910 = vsub.s32 %v904, %v909
      %v911 = vsub.s32 0, %v910
      %v912 = vsel %vm902, %v911, %v910
      %vm913 = vcmp.lt.s32.totalorder %v617, 0
      %v914 = vsub.s32 0, %v617
      %v915 = vsel %vm913, %v914, %v617
      %v916 = vmul.u32.u64.compose %v915, 3817748708
      %v917 = vextract.low.u32 %v916
      %v918 = vextract.high.u32 %v916
      %v919 = vshrl.u32 %v918, 4
      %v920 = vmul.u32 %v919, 18
      %v921 = vsub.s32 %v915, %v920
      %v922 = vsub.s32 0, %v921
      %v923 = vsel %vm913, %v922, %v921
      %vm924 = vcmp.lt.s32.totalorder %v618, 0
      %v925 = vsub.s32 0, %v618
      %v926 = vsel %vm924, %v925, %v618
      %v927 = vmul.u32.u64.compose %v926, 3817748708
      %v928 = vextract.low.u32 %v927
      %v929 = vextract.high.u32 %v927
      %v930 = vshrl.u32 %v929, 4
      %v931 = vmul.u32 %v930, 18
      %v932 = vsub.s32 %v926, %v931
      %v933 = vsub.s32 0, %v932
      %v934 = vsel %vm924, %v933, %v932
      %vm935 = vcmp.lt.s32.totalorder %v619, 0
      %v936 = vsub.s32 0, %v619
      %v937 = vsel %vm935, %v936, %v619
      %v938 = vmul.u32.u64.compose %v937, 3817748708
      %v939 = vextract.low.u32 %v938
      %v940 = vextract.high.u32 %v938
      %v941 = vshrl.u32 %v940, 4
      %v942 = vmul.u32 %v941, 18
      %v943 = vsub.s32 %v937, %v942
      %v944 = vsub.s32 0, %v943
      %v945 = vsel %vm935, %v944, %v943
      %vm946 = vcmp.lt.s32.totalorder %v620, 0
      %v947 = vsub.s32 0, %v620
      %v948 = vsel %vm946, %v947, %v620
      %v949 = vmul.u32.u64.compose %v948, 3817748708
      %v950 = vextract.low.u32 %v949
      %v951 = vextract.high.u32 %v949
      %v952 = vshrl.u32 %v951, 4
      %v953 = vmul.u32 %v952, 18
      %v954 = vsub.s32 %v948, %v953
      %v955 = vsub.s32 0, %v954
      %v956 = vsel %vm946, %v955, %v954
      %vm957 = vcmp.lt.s32.totalorder %v621, 0
      %v958 = vsub.s32 0, %v621
      %v959 = vsel %vm957, %v958, %v621
      %v960 = vmul.u32.u64.compose %v959, 3817748708
      %v961 = vextract.low.u32 %v960
      %v962 = vextract.high.u32 %v960
      %v963 = vshrl.u32 %v962, 4
      %v964 = vmul.u32 %v963, 18
      %v965 = vsub.s32 %v959, %v964
      %v966 = vsub.s32 0, %v965
      %v967 = vsel %vm957, %v966, %v965
      %vm968 = vcmp.lt.s32.totalorder %v622, 0
      %v969 = vsub.s32 0, %v622
      %v970 = vsel %vm968, %v969, %v622
      %v971 = vmul.u32.u64.compose %v970, 3817748708
      %v972 = vextract.low.u32 %v971
      %v973 = vextract.high.u32 %v971
      %v974 = vshrl.u32 %v973, 4
      %v975 = vmul.u32 %v974, 18
      %v976 = vsub.s32 %v970, %v975
      %v977 = vsub.s32 0, %v976
      %v978 = vsel %vm968, %v977, %v976
      %vm979 = vcmp.lt.s32.totalorder %v623, 0
      %v980 = vsub.s32 0, %v623
      %v981 = vsel %vm979, %v980, %v623
      %v982 = vmul.u32.u64.compose %v981, 3817748708
      %v983 = vextract.low.u32 %v982
      %v984 = vextract.high.u32 %v982
      %v985 = vshrl.u32 %v984, 4
      %v986 = vmul.u32 %v985, 18
      %v987 = vsub.s32 %v981, %v986
      %v988 = vsub.s32 0, %v987
      %v989 = vsel %vm979, %v988, %v987
      %vm990 = vcmp.lt.s32.totalorder %v624, 0
      %v991 = vsub.s32 0, %v624
      %v992 = vsel %vm990, %v991, %v624
      %v993 = vmul.u32.u64.compose %v992, 3817748708
      %v994 = vextract.low.u32 %v993
      %v995 = vextract.high.u32 %v993
      %v996 = vshrl.u32 %v995, 4
      %v997 = vmul.u32 %v996, 18
      %v998 = vsub.s32 %v992, %v997
      %v999 = vsub.s32 0, %v998
      %v1000 = vsel %vm990, %v999, %v998
      %vm1001 = vcmp.lt.s32.totalorder %v625, 0
      %v1002 = vsub.s32 0, %v625
      %v1003 = vsel %vm1001, %v1002, %v625
      %v1004 = vmul.u32.u64.compose %v1003, 3817748708
      %v1005 = vextract.low.u32 %v1004
      %v1006 = vextract.high.u32 %v1004
      %v1007 = vshrl.u32 %v1006, 4
      %v1008 = vmul.u32 %v1007, 18
      %v1009 = vsub.s32 %v1003, %v1008
      %v1010 = vsub.s32 0, %v1009
      %v1011 = vsel %vm1001, %v1010, %v1009
      %vm1012 = vcmp.lt.s32.totalorder %v626, 0
      %v1013 = vsub.s32 0, %v626
      %v1014 = vsel %vm1012, %v1013, %v626
      %v1015 = vmul.u32.u64.compose %v1014, 3817748708
      %v1016 = vextract.low.u32 %v1015
      %v1017 = vextract.high.u32 %v1015
      %v1018 = vshrl.u32 %v1017, 4
      %v1019 = vmul.u32 %v1018, 18
      %v1020 = vsub.s32 %v1014, %v1019
      %v1021 = vsub.s32 0, %v1020
      %v1022 = vsel %vm1012, %v1021, %v1020
      %vm1023 = vcmp.lt.s32.totalorder %v627, 0
      %v1024 = vsub.s32 0, %v627
      %v1025 = vsel %vm1023, %v1024, %v627
      %v1026 = vmul.u32.u64.compose %v1025, 3817748708
      %v1027 = vextract.low.u32 %v1026
      %v1028 = vextract.high.u32 %v1026
      %v1029 = vshrl.u32 %v1028, 4
      %v1030 = vmul.u32 %v1029, 18
      %v1031 = vsub.s32 %v1025, %v1030
      %v1032 = vsub.s32 0, %v1031
      %v1033 = vsel %vm1023, %v1032, %v1031
      %vm1034 = vcmp.lt.s32.totalorder %v628, 0
      %v1035 = vsub.s32 0, %v628
      %v1036 = vsel %vm1034, %v1035, %v628
      %v1037 = vmul.u32.u64.compose %v1036, 3817748708
      %v1038 = vextract.low.u32 %v1037
      %v1039 = vextract.high.u32 %v1037
      %v1040 = vshrl.u32 %v1039, 4
      %v1041 = vmul.u32 %v1040, 18
      %v1042 = vsub.s32 %v1036, %v1041
      %v1043 = vsub.s32 0, %v1042
      %v1044 = vsel %vm1034, %v1043, %v1042
      %vm1045 = vcmp.lt.s32.totalorder %v629, 0
      %v1046 = vsub.s32 0, %v629
      %v1047 = vsel %vm1045, %v1046, %v629
      %v1048 = vmul.u32.u64.compose %v1047, 3817748708
      %v1049 = vextract.low.u32 %v1048
      %v1050 = vextract.high.u32 %v1048
      %v1051 = vshrl.u32 %v1050, 4
      %v1052 = vmul.u32 %v1051, 18
      %v1053 = vsub.s32 %v1047, %v1052
      %v1054 = vsub.s32 0, %v1053
      %v1055 = vsel %vm1045, %v1054, %v1053
      %vm1056 = vcmp.lt.s32.totalorder %v630, 0
      %v1057 = vsub.s32 0, %v630
      %v1058 = vsel %vm1056, %v1057, %v630
      %v1059 = vmul.u32.u64.compose %v1058, 3817748708
      %v1060 = vextract.low.u32 %v1059
      %v1061 = vextract.high.u32 %v1059
      %v1062 = vshrl.u32 %v1061, 4
      %v1063 = vmul.u32 %v1062, 18
      %v1064 = vsub.s32 %v1058, %v1063
      %v1065 = vsub.s32 0, %v1064
      %v1066 = vsel %vm1056, %v1065, %v1064
      %vm1067 = vcmp.lt.s32.totalorder %v631, 0
      %v1068 = vsub.s32 0, %v631
      %v1069 = vsel %vm1067, %v1068, %v631
      %v1070 = vmul.u32.u64.compose %v1069, 3817748708
      %v1071 = vextract.low.u32 %v1070
      %v1072 = vextract.high.u32 %v1070
      %v1073 = vshrl.u32 %v1072, 4
      %v1074 = vmul.u32 %v1073, 18
      %v1075 = vsub.s32 %v1069, %v1074
      %v1076 = vsub.s32 0, %v1075
      %v1077 = vsel %vm1067, %v1076, %v1075
      %vm1078 = vcmp.lt.s32.totalorder %v632, 0
      %v1079 = vsub.s32 0, %v632
      %v1080 = vsel %vm1078, %v1079, %v632
      %v1081 = vmul.u32.u64.compose %v1080, 3817748708
      %v1082 = vextract.low.u32 %v1081
      %v1083 = vextract.high.u32 %v1081
      %v1084 = vshrl.u32 %v1083, 4
      %v1085 = vmul.u32 %v1084, 18
      %v1086 = vsub.s32 %v1080, %v1085
      %v1087 = vsub.s32 0, %v1086
      %v1088 = vsel %vm1078, %v1087, %v1086
      %vm1089 = vcmp.lt.s32.totalorder %v633, 0
      %v1090 = vsub.s32 0, %v633
      %v1091 = vsel %vm1089, %v1090, %v633
      %v1092 = vmul.u32.u64.compose %v1091, 3817748708
      %v1093 = vextract.low.u32 %v1092
      %v1094 = vextract.high.u32 %v1092
      %v1095 = vshrl.u32 %v1094, 4
      %v1096 = vmul.u32 %v1095, 18
      %v1097 = vsub.s32 %v1091, %v1096
      %v1098 = vsub.s32 0, %v1097
      %v1099 = vsel %vm1089, %v1098, %v1097
      %vm1100 = vcmp.lt.s32.totalorder %v634, 0
      %v1101 = vsub.s32 0, %v634
      %v1102 = vsel %vm1100, %v1101, %v634
      %v1103 = vmul.u32.u64.compose %v1102, 3817748708
      %v1104 = vextract.low.u32 %v1103
      %v1105 = vextract.high.u32 %v1103
      %v1106 = vshrl.u32 %v1105, 4
      %v1107 = vmul.u32 %v1106, 18
      %v1108 = vsub.s32 %v1102, %v1107
      %v1109 = vsub.s32 0, %v1108
      %v1110 = vsel %vm1100, %v1109, %v1108
      %vm1111 = vcmp.lt.s32.totalorder %v635, 0
      %v1112 = vsub.s32 0, %v635
      %v1113 = vsel %vm1111, %v1112, %v635
      %v1114 = vmul.u32.u64.compose %v1113, 3817748708
      %v1115 = vextract.low.u32 %v1114
      %v1116 = vextract.high.u32 %v1114
      %v1117 = vshrl.u32 %v1116, 4
      %v1118 = vmul.u32 %v1117, 18
      %v1119 = vsub.s32 %v1113, %v1118
      %v1120 = vsub.s32 0, %v1119
      %v1121 = vsel %vm1111, %v1120, %v1119
      %vm1122 = vcmp.lt.s32.totalorder %v636, 0
      %v1123 = vsub.s32 0, %v636
      %v1124 = vsel %vm1122, %v1123, %v636
      %v1125 = vmul.u32.u64.compose %v1124, 3817748708
      %v1126 = vextract.low.u32 %v1125
      %v1127 = vextract.high.u32 %v1125
      %v1128 = vshrl.u32 %v1127, 4
      %v1129 = vmul.u32 %v1128, 18
      %v1130 = vsub.s32 %v1124, %v1129
      %v1131 = vsub.s32 0, %v1130
      %v1132 = vsel %vm1122, %v1131, %v1130
      %vm1133 = vcmp.lt.s32.totalorder %v637, 0
      %v1134 = vsub.s32 0, %v637
      %v1135 = vsel %vm1133, %v1134, %v637
      %v1136 = vmul.u32.u64.compose %v1135, 3817748708
      %v1137 = vextract.low.u32 %v1136
      %v1138 = vextract.high.u32 %v1136
      %v1139 = vshrl.u32 %v1138, 4
      %v1140 = vmul.u32 %v1139, 18
      %v1141 = vsub.s32 %v1135, %v1140
      %v1142 = vsub.s32 0, %v1141
      %v1143 = vsel %vm1133, %v1142, %v1141
      %vm1144 = vcmp.lt.s32.totalorder %v638, 0
      %v1145 = vsub.s32 0, %v638
      %v1146 = vsel %vm1144, %v1145, %v638
      %v1147 = vmul.u32.u64.compose %v1146, 3817748708
      %v1148 = vextract.low.u32 %v1147
      %v1149 = vextract.high.u32 %v1147
      %v1150 = vshrl.u32 %v1149, 4
      %v1151 = vmul.u32 %v1150, 18
      %v1152 = vsub.s32 %v1146, %v1151
      %v1153 = vsub.s32 0, %v1152
      %v1154 = vsel %vm1144, %v1153, %v1152
      %vm1155 = vcmp.lt.s32.totalorder %v639, 0
      %v1156 = vsub.s32 0, %v639
      %v1157 = vsel %vm1155, %v1156, %v639
      %v1158 = vmul.u32.u64.compose %v1157, 3817748708
      %v1159 = vextract.low.u32 %v1158
      %v1160 = vextract.high.u32 %v1158
      %v1161 = vshrl.u32 %v1160, 4
      %v1162 = vmul.u32 %v1161, 18
      %v1163 = vsub.s32 %v1157, %v1162
      %v1164 = vsub.s32 0, %v1163
      %v1165 = vsel %vm1155, %v1164, %v1163
      %vm1166 = vcmp.lt.s32.totalorder %v640, 0
      %v1167 = vsub.s32 0, %v640
      %v1168 = vsel %vm1166, %v1167, %v640
      %v1169 = vmul.u32.u64.compose %v1168, 3817748708
      %v1170 = vextract.low.u32 %v1169
      %v1171 = vextract.high.u32 %v1169
      %v1172 = vshrl.u32 %v1171, 4
      %v1173 = vmul.u32 %v1172, 18
      %v1174 = vsub.s32 %v1168, %v1173
      %v1175 = vsub.s32 0, %v1174
      %v1176 = vsel %vm1166, %v1175, %v1174
      %vm1177 = vcmp.lt.s32.totalorder %v641, 0
      %v1178 = vsub.s32 0, %v641
      %v1179 = vsel %vm1177, %v1178, %v641
      %v1180 = vmul.u32.u64.compose %v1179, 3817748708
      %v1181 = vextract.low.u32 %v1180
      %v1182 = vextract.high.u32 %v1180
      %v1183 = vshrl.u32 %v1182, 4
      %v1184 = vmul.u32 %v1183, 18
      %v1185 = vsub.s32 %v1179, %v1184
      %v1186 = vsub.s32 0, %v1185
      %v1187 = vsel %vm1177, %v1186, %v1185
      %vm1188 = vcmp.lt.s32.totalorder %v642, 0
      %v1189 = vsub.s32 0, %v642
      %v1190 = vsel %vm1188, %v1189, %v642
      %v1191 = vmul.u32.u64.compose %v1190, 3817748708
      %v1192 = vextract.low.u32 %v1191
      %v1193 = vextract.high.u32 %v1191
      %v1194 = vshrl.u32 %v1193, 4
      %v1195 = vmul.u32 %v1194, 18
      %v1196 = vsub.s32 %v1190, %v1195
      %v1197 = vsub.s32 0, %v1196
      %v1198 = vsel %vm1188, %v1197, %v1196
      %vm1199 = vcmp.lt.s32.totalorder %v643, 0
      %v1200 = vsub.s32 0, %v643
      %v1201 = vsel %vm1199, %v1200, %v643
      %v1202 = vmul.u32.u64.compose %v1201, 3817748708
      %v1203 = vextract.low.u32 %v1202
      %v1204 = vextract.high.u32 %v1202
      %v1205 = vshrl.u32 %v1204, 4
      %v1206 = vmul.u32 %v1205, 18
      %v1207 = vsub.s32 %v1201, %v1206
      %v1208 = vsub.s32 0, %v1207
      %v1209 = vsel %vm1199, %v1208, %v1207
      %vm1210 = vcmp.lt.s32.totalorder %v644, 0
      %v1211 = vsub.s32 0, %v644
      %v1212 = vsel %vm1210, %v1211, %v644
      %v1213 = vmul.u32.u64.compose %v1212, 3817748708
      %v1214 = vextract.low.u32 %v1213
      %v1215 = vextract.high.u32 %v1213
      %v1216 = vshrl.u32 %v1215, 4
      %v1217 = vmul.u32 %v1216, 18
      %v1218 = vsub.s32 %v1212, %v1217
      %v1219 = vsub.s32 0, %v1218
      %v1220 = vsel %vm1210, %v1219, %v1218
      %vm1221 = vcmp.ne.s32.totalorder %v703, 0
      %vm1222 = vcmp.ne.s32.totalorder %v714, 0
      %vm1223 = vcmp.ne.s32.totalorder %v725, 0
      %vm1224 = vcmp.ne.s32.totalorder %v736, 0
      %vm1225 = vcmp.ne.s32.totalorder %v747, 0
      %vm1226 = vcmp.ne.s32.totalorder %v758, 0
      %vm1227 = vcmp.ne.s32.totalorder %v769, 0
      %vm1228 = vcmp.ne.s32.totalorder %v780, 0
      %vm1229 = vcmp.ne.s32.totalorder %v791, 0
      %vm1230 = vcmp.ne.s32.totalorder %v802, 0
      %vm1231 = vcmp.ne.s32.totalorder %v813, 0
      %vm1232 = vcmp.ne.s32.totalorder %v824, 0
      %vm1233 = vcmp.ne.s32.totalorder %v835, 0
      %vm1234 = vcmp.ne.s32.totalorder %v846, 0
      %vm1235 = vcmp.ne.s32.totalorder %v857, 0
      %vm1236 = vcmp.ne.s32.totalorder %v868, 0
      %vm1237 = vcmp.ne.s32.totalorder %v879, 0
      %vm1238 = vcmp.ne.s32.totalorder %v890, 0
      %vm1239 = vcmp.ne.s32.totalorder %v901, 0
      %vm1240 = vcmp.ne.s32.totalorder %v912, 0
      %vm1241 = vcmp.ne.s32.totalorder %v923, 0
      %vm1242 = vcmp.ne.s32.totalorder %v934, 0
      %vm1243 = vcmp.ne.s32.totalorder %v945, 0
      %vm1244 = vcmp.ne.s32.totalorder %v956, 0
      %vm1245 = vcmp.ne.s32.totalorder %v967, 0
      %vm1246 = vcmp.ne.s32.totalorder %v978, 0
      %vm1247 = vcmp.ne.s32.totalorder %v989, 0
      %vm1248 = vcmp.ne.s32.totalorder %v1000, 0
      %vm1249 = vcmp.ne.s32.totalorder %v1011, 0
      %vm1250 = vcmp.ne.s32.totalorder %v1022, 0
      %vm1251 = vcmp.ne.s32.totalorder %v1033, 0
      %vm1252 = vcmp.ne.s32.totalorder %v1044, 0
      %vm1253 = vcmp.ne.s32.totalorder %v1055, 0
      %vm1254 = vcmp.ne.s32.totalorder %v1066, 0
      %vm1255 = vcmp.ne.s32.totalorder %v1077, 0
      %vm1256 = vcmp.ne.s32.totalorder %v1088, 0
      %vm1257 = vcmp.ne.s32.totalorder %v1099, 0
      %vm1258 = vcmp.ne.s32.totalorder %v1110, 0
      %vm1259 = vcmp.ne.s32.totalorder %v1121, 0
      %vm1260 = vcmp.ne.s32.totalorder %v1132, 0
      %vm1261 = vcmp.ne.s32.totalorder %v1143, 0
      %vm1262 = vcmp.ne.s32.totalorder %v1154, 0
      %vm1263 = vcmp.ne.s32.totalorder %v1165, 0
      %vm1264 = vcmp.ne.s32.totalorder %v1176, 0
      %vm1265 = vcmp.ne.s32.totalorder %v1187, 0
      %vm1266 = vcmp.ne.s32.totalorder %v1198, 0
      %vm1267 = vcmp.ne.s32.totalorder %v1209, 0
      %vm1268 = vcmp.ne.s32.totalorder %v1220, 0
      %vm1269 = vcmp.lt.s32.totalorder %v703, 0
      %vm1270 = vcmp.lt.s32.totalorder %v714, 0
      %vm1271 = vcmp.lt.s32.totalorder %v725, 0
      %vm1272 = vcmp.lt.s32.totalorder %v736, 0
      %vm1273 = vcmp.lt.s32.totalorder %v747, 0
      %vm1274 = vcmp.lt.s32.totalorder %v758, 0
      %vm1275 = vcmp.lt.s32.totalorder %v769, 0
      %vm1276 = vcmp.lt.s32.totalorder %v780, 0
      %vm1277 = vcmp.lt.s32.totalorder %v791, 0
      %vm1278 = vcmp.lt.s32.totalorder %v802, 0
      %vm1279 = vcmp.lt.s32.totalorder %v813, 0
      %vm1280 = vcmp.lt.s32.totalorder %v824, 0
      %vm1281 = vcmp.lt.s32.totalorder %v835, 0
      %vm1282 = vcmp.lt.s32.totalorder %v846, 0
      %vm1283 = vcmp.lt.s32.totalorder %v857, 0
      %vm1284 = vcmp.lt.s32.totalorder %v868, 0
      %vm1285 = vcmp.lt.s32.totalorder %v879, 0
      %vm1286 = vcmp.lt.s32.totalorder %v890, 0
      %vm1287 = vcmp.lt.s32.totalorder %v901, 0
      %vm1288 = vcmp.lt.s32.totalorder %v912, 0
      %vm1289 = vcmp.lt.s32.totalorder %v923, 0
      %vm1290 = vcmp.lt.s32.totalorder %v934, 0
      %vm1291 = vcmp.lt.s32.totalorder %v945, 0
      %vm1292 = vcmp.lt.s32.totalorder %v956, 0
      %vm1293 = vcmp.lt.s32.totalorder %v967, 0
      %vm1294 = vcmp.lt.s32.totalorder %v978, 0
      %vm1295 = vcmp.lt.s32.totalorder %v989, 0
      %vm1296 = vcmp.lt.s32.totalorder %v1000, 0
      %vm1297 = vcmp.lt.s32.totalorder %v1011, 0
      %vm1298 = vcmp.lt.s32.totalorder %v1022, 0
      %vm1299 = vcmp.lt.s32.totalorder %v1033, 0
      %vm1300 = vcmp.lt.s32.totalorder %v1044, 0
      %vm1301 = vcmp.lt.s32.totalorder %v1055, 0
      %vm1302 = vcmp.lt.s32.totalorder %v1066, 0
      %vm1303 = vcmp.lt.s32.totalorder %v1077, 0
      %vm1304 = vcmp.lt.s32.totalorder %v1088, 0
      %vm1305 = vcmp.lt.s32.totalorder %v1099, 0
      %vm1306 = vcmp.lt.s32.totalorder %v1110, 0
      %vm1307 = vcmp.lt.s32.totalorder %v1121, 0
      %vm1308 = vcmp.lt.s32.totalorder %v1132, 0
      %vm1309 = vcmp.lt.s32.totalorder %v1143, 0
      %vm1310 = vcmp.lt.s32.totalorder %v1154, 0
      %vm1311 = vcmp.lt.s32.totalorder %v1165, 0
      %vm1312 = vcmp.lt.s32.totalorder %v1176, 0
      %vm1313 = vcmp.lt.s32.totalorder %v1187, 0
      %vm1314 = vcmp.lt.s32.totalorder %v1198, 0
      %vm1315 = vcmp.lt.s32.totalorder %v1209, 0
      %vm1316 = vcmp.lt.s32.totalorder %v1220, 0
      %vm1317 = vmand %vm1269, %vm1221
      %vm1318 = vmand %vm1270, %vm1222
      %vm1319 = vmand %vm1271, %vm1223
      %vm1320 = vmand %vm1272, %vm1224
      %vm1321 = vmand %vm1273, %vm1225
      %vm1322 = vmand %vm1274, %vm1226
      %vm1323 = vmand %vm1275, %vm1227
      %vm1324 = vmand %vm1276, %vm1228
      %vm1325 = vmand %vm1277, %vm1229
      %vm1326 = vmand %vm1278, %vm1230
      %vm1327 = vmand %vm1279, %vm1231
      %vm1328 = vmand %vm1280, %vm1232
      %vm1329 = vmand %vm1281, %vm1233
      %vm1330 = vmand %vm1282, %vm1234
      %vm1331 = vmand %vm1283, %vm1235
      %vm1332 = vmand %vm1284, %vm1236
      %vm1333 = vmand %vm1285, %vm1237
      %vm1334 = vmand %vm1286, %vm1238
      %vm1335 = vmand %vm1287, %vm1239
      %vm1336 = vmand %vm1288, %vm1240
      %vm1337 = vmand %vm1289, %vm1241
      %vm1338 = vmand %vm1290, %vm1242
      %vm1339 = vmand %vm1291, %vm1243
      %vm1340 = vmand %vm1292, %vm1244
      %vm1341 = vmand %vm1293, %vm1245
      %vm1342 = vmand %vm1294, %vm1246
      %vm1343 = vmand %vm1295, %vm1247
      %vm1344 = vmand %vm1296, %vm1248
      %vm1345 = vmand %vm1297, %vm1249
      %vm1346 = vmand %vm1298, %vm1250
      %vm1347 = vmand %vm1299, %vm1251
      %vm1348 = vmand %vm1300, %vm1252
      %vm1349 = vmand %vm1301, %vm1253
      %vm1350 = vmand %vm1302, %vm1254
      %vm1351 = vmand %vm1303, %vm1255
      %vm1352 = vmand %vm1304, %vm1256
      %vm1353 = vmand %vm1305, %vm1257
      %vm1354 = vmand %vm1306, %vm1258
      %vm1355 = vmand %vm1307, %vm1259
      %vm1356 = vmand %vm1308, %vm1260
      %vm1357 = vmand %vm1309, %vm1261
      %vm1358 = vmand %vm1310, %vm1262
      %vm1359 = vmand %vm1311, %vm1263
      %vm1360 = vmand %vm1312, %vm1264
      %vm1361 = vmand %vm1313, %vm1265
      %vm1362 = vmand %vm1314, %vm1266
      %vm1363 = vmand %vm1315, %vm1267
      %vm1364 = vmand %vm1316, %vm1268
      %v1365 = vadd.s32 %v703, 18
      %v1366 = vadd.s32 %v714, 18
      %v1367 = vadd.s32 %v725, 18
      %v1368 = vadd.s32 %v736, 18
      %v1369 = vadd.s32 %v747, 18
      %v1370 = vadd.s32 %v758, 18
      %v1371 = vadd.s32 %v769, 18
      %v1372 = vadd.s32 %v780, 18
      %v1373 = vadd.s32 %v791, 18
      %v1374 = vadd.s32 %v802, 18
      %v1375 = vadd.s32 %v813, 18
      %v1376 = vadd.s32 %v824, 18
      %v1377 = vadd.s32 %v835, 18
      %v1378 = vadd.s32 %v846, 18
      %v1379 = vadd.s32 %v857, 18
      %v1380 = vadd.s32 %v868, 18
      %v1381 = vadd.s32 %v879, 18
      %v1382 = vadd.s32 %v890, 18
      %v1383 = vadd.s32 %v901, 18
      %v1384 = vadd.s32 %v912, 18
      %v1385 = vadd.s32 %v923, 18
      %v1386 = vadd.s32 %v934, 18
      %v1387 = vadd.s32 %v945, 18
      %v1388 = vadd.s32 %v956, 18
      %v1389 = vadd.s32 %v967, 18
      %v1390 = vadd.s32 %v978, 18
      %v1391 = vadd.s32 %v989, 18
      %v1392 = vadd.s32 %v1000, 18
      %v1393 = vadd.s32 %v1011, 18
      %v1394 = vadd.s32 %v1022, 18
      %v1395 = vadd.s32 %v1033, 18
      %v1396 = vadd.s32 %v1044, 18
      %v1397 = vadd.s32 %v1055, 18
      %v1398 = vadd.s32 %v1066, 18
      %v1399 = vadd.s32 %v1077, 18
      %v1400 = vadd.s32 %v1088, 18
      %v1401 = vadd.s32 %v1099, 18
      %v1402 = vadd.s32 %v1110, 18
      %v1403 = vadd.s32 %v1121, 18
      %v1404 = vadd.s32 %v1132, 18
      %v1405 = vadd.s32 %v1143, 18
      %v1406 = vadd.s32 %v1154, 18
      %v1407 = vadd.s32 %v1165, 18
      %v1408 = vadd.s32 %v1176, 18
      %v1409 = vadd.s32 %v1187, 18
      %v1410 = vadd.s32 %v1198, 18
      %v1411 = vadd.s32 %v1209, 18
      %v1412 = vadd.s32 %v1220, 18
      %v1413 = vsel %vm1317, %v1365, %v703
      %v1414 = vsel %vm1318, %v1366, %v714
      %v1415 = vsel %vm1319, %v1367, %v725
      %v1416 = vsel %vm1320, %v1368, %v736
      %v1417 = vsel %vm1321, %v1369, %v747
      %v1418 = vsel %vm1322, %v1370, %v758
      %v1419 = vsel %vm1323, %v1371, %v769
      %v1420 = vsel %vm1324, %v1372, %v780
      %v1421 = vsel %vm1325, %v1373, %v791
      %v1422 = vsel %vm1326, %v1374, %v802
      %v1423 = vsel %vm1327, %v1375, %v813
      %v1424 = vsel %vm1328, %v1376, %v824
      %v1425 = vsel %vm1329, %v1377, %v835
      %v1426 = vsel %vm1330, %v1378, %v846
      %v1427 = vsel %vm1331, %v1379, %v857
      %v1428 = vsel %vm1332, %v1380, %v868
      %v1429 = vsel %vm1333, %v1381, %v879
      %v1430 = vsel %vm1334, %v1382, %v890
      %v1431 = vsel %vm1335, %v1383, %v901
      %v1432 = vsel %vm1336, %v1384, %v912
      %v1433 = vsel %vm1337, %v1385, %v923
      %v1434 = vsel %vm1338, %v1386, %v934
      %v1435 = vsel %vm1339, %v1387, %v945
      %v1436 = vsel %vm1340, %v1388, %v956
      %v1437 = vsel %vm1341, %v1389, %v967
      %v1438 = vsel %vm1342, %v1390, %v978
      %v1439 = vsel %vm1343, %v1391, %v989
      %v1440 = vsel %vm1344, %v1392, %v1000
      %v1441 = vsel %vm1345, %v1393, %v1011
      %v1442 = vsel %vm1346, %v1394, %v1022
      %v1443 = vsel %vm1347, %v1395, %v1033
      %v1444 = vsel %vm1348, %v1396, %v1044
      %v1445 = vsel %vm1349, %v1397, %v1055
      %v1446 = vsel %vm1350, %v1398, %v1066
      %v1447 = vsel %vm1351, %v1399, %v1077
      %v1448 = vsel %vm1352, %v1400, %v1088
      %v1449 = vsel %vm1353, %v1401, %v1099
      %v1450 = vsel %vm1354, %v1402, %v1110
      %v1451 = vsel %vm1355, %v1403, %v1121
      %v1452 = vsel %vm1356, %v1404, %v1132
      %v1453 = vsel %vm1357, %v1405, %v1143
      %v1454 = vsel %vm1358, %v1406, %v1154
      %v1455 = vsel %vm1359, %v1407, %v1165
      %v1456 = vsel %vm1360, %v1408, %v1176
      %v1457 = vsel %vm1361, %v1409, %v1187
      %v1458 = vsel %vm1362, %v1410, %v1198
      %v1459 = vsel %vm1363, %v1411, %v1209
      %v1460 = vsel %vm1364, %v1412, %v1220
      %vm1461 = vcmp.lt.s32.totalorder %v1413, 16
      %vm1462 = vcmp.lt.s32.totalorder %v1414, 16
      %vm1463 = vcmp.lt.s32.totalorder %v1415, 16
      %vm1464 = vcmp.lt.s32.totalorder %v1416, 16
      %vm1465 = vcmp.lt.s32.totalorder %v1417, 16
      %vm1466 = vcmp.lt.s32.totalorder %v1418, 16
      %vm1467 = vcmp.lt.s32.totalorder %v1419, 16
      %vm1468 = vcmp.lt.s32.totalorder %v1420, 16
      %vm1469 = vcmp.lt.s32.totalorder %v1421, 16
      %vm1470 = vcmp.lt.s32.totalorder %v1422, 16
      %vm1471 = vcmp.lt.s32.totalorder %v1423, 16
      %vm1472 = vcmp.lt.s32.totalorder %v1424, 16
      %vm1473 = vcmp.lt.s32.totalorder %v1425, 16
      %vm1474 = vcmp.lt.s32.totalorder %v1426, 16
      %vm1475 = vcmp.lt.s32.totalorder %v1427, 16
      %vm1476 = vcmp.lt.s32.totalorder %v1428, 16
      %vm1477 = vcmp.lt.s32.totalorder %v1429, 16
      %vm1478 = vcmp.lt.s32.totalorder %v1430, 16
      %vm1479 = vcmp.lt.s32.totalorder %v1431, 16
      %vm1480 = vcmp.lt.s32.totalorder %v1432, 16
      %vm1481 = vcmp.lt.s32.totalorder %v1433, 16
      %vm1482 = vcmp.lt.s32.totalorder %v1434, 16
      %vm1483 = vcmp.lt.s32.totalorder %v1435, 16
      %vm1484 = vcmp.lt.s32.totalorder %v1436, 16
      %vm1485 = vcmp.lt.s32.totalorder %v1437, 16
      %vm1486 = vcmp.lt.s32.totalorder %v1438, 16
      %vm1487 = vcmp.lt.s32.totalorder %v1439, 16
      %vm1488 = vcmp.lt.s32.totalorder %v1440, 16
      %vm1489 = vcmp.lt.s32.totalorder %v1441, 16
      %vm1490 = vcmp.lt.s32.totalorder %v1442, 16
      %vm1491 = vcmp.lt.s32.totalorder %v1443, 16
      %vm1492 = vcmp.lt.s32.totalorder %v1444, 16
      %vm1493 = vcmp.lt.s32.totalorder %v1445, 16
      %vm1494 = vcmp.lt.s32.totalorder %v1446, 16
      %vm1495 = vcmp.lt.s32.totalorder %v1447, 16
      %vm1496 = vcmp.lt.s32.totalorder %v1448, 16
      %vm1497 = vcmp.lt.s32.totalorder %v1449, 16
      %vm1498 = vcmp.lt.s32.totalorder %v1450, 16
      %vm1499 = vcmp.lt.s32.totalorder %v1451, 16
      %vm1500 = vcmp.lt.s32.totalorder %v1452, 16
      %vm1501 = vcmp.lt.s32.totalorder %v1453, 16
      %vm1502 = vcmp.lt.s32.totalorder %v1454, 16
      %vm1503 = vcmp.lt.s32.totalorder %v1455, 16
      %vm1504 = vcmp.lt.s32.totalorder %v1456, 16
      %vm1505 = vcmp.lt.s32.totalorder %v1457, 16
      %vm1506 = vcmp.lt.s32.totalorder %v1458, 16
      %vm1507 = vcmp.lt.s32.totalorder %v1459, 16
      %vm1508 = vcmp.lt.s32.totalorder %v1460, 16
      %vm1509 = vmand %vm645, %vm1461
      %vm1510 = vmand %vm646, %vm1462
      %vm1511 = vmand %vm647, %vm1463
      %vm1512 = vmand %vm648, %vm1464
      %vm1513 = vmand %vm649, %vm1465
      %vm1514 = vmand %vm650, %vm1466
      %vm1515 = vmand %vm651, %vm1467
      %vm1516 = vmand %vm652, %vm1468
      %vm1517 = vmand %vm653, %vm1469
      %vm1518 = vmand %vm654, %vm1470
      %vm1519 = vmand %vm655, %vm1471
      %vm1520 = vmand %vm656, %vm1472
      %vm1521 = vmand %vm657, %vm1473
      %vm1522 = vmand %vm658, %vm1474
      %vm1523 = vmand %vm659, %vm1475
      %vm1524 = vmand %vm660, %vm1476
      %vm1525 = vmand %vm661, %vm1477
      %vm1526 = vmand %vm662, %vm1478
      %vm1527 = vmand %vm663, %vm1479
      %vm1528 = vmand %vm664, %vm1480
      %vm1529 = vmand %vm665, %vm1481
      %vm1530 = vmand %vm666, %vm1482
      %vm1531 = vmand %vm667, %vm1483
      %vm1532 = vmand %vm668, %vm1484
      %vm1533 = vmand %vm669, %vm1485
      %vm1534 = vmand %vm670, %vm1486
      %vm1535 = vmand %vm671, %vm1487
      %vm1536 = vmand %vm672, %vm1488
      %vm1537 = vmand %vm673, %vm1489
      %vm1538 = vmand %vm674, %vm1490
      %vm1539 = vmand %vm675, %vm1491
      %vm1540 = vmand %vm676, %vm1492
      %vm1541 = vmand %vm677, %vm1493
      %vm1542 = vmand %vm678, %vm1494
      %vm1543 = vmand %vm679, %vm1495
      %vm1544 = vmand %vm680, %vm1496
      %vm1545 = vmand %vm681, %vm1497
      %vm1546 = vmand %vm682, %vm1498
      %vm1547 = vmand %vm683, %vm1499
      %vm1548 = vmand %vm684, %vm1500
      %vm1549 = vmand %vm685, %vm1501
      %vm1550 = vmand %vm686, %vm1502
      %vm1551 = vmand %vm687, %vm1503
      %vm1552 = vmand %vm688, %vm1504
      %vm1553 = vmand %vm689, %vm1505
      %vm1554 = vmand %vm690, %vm1506
      %vm1555 = vmand %vm691, %vm1507
      %vm1556 = vmand %vm692, %vm1508
      %v1557 = vsel %vm1509, 1, 0
      %v1558 = vsel %vm1510, 1, 0
      %v1559 = vsel %vm1511, 1, 0
      %v1560 = vsel %vm1512, 1, 0
      %v1561 = vsel %vm1513, 1, 0
      %v1562 = vsel %vm1514, 1, 0
      %v1563 = vsel %vm1515, 1, 0
      %v1564 = vsel %vm1516, 1, 0
      %v1565 = vsel %vm1517, 1, 0
      %v1566 = vsel %vm1518, 1, 0
      %v1567 = vsel %vm1519, 1, 0
      %v1568 = vsel %vm1520, 1, 0
      %v1569 = vsel %vm1521, 1, 0
      %v1570 = vsel %vm1522, 1, 0
      %v1571 = vsel %vm1523, 1, 0
      %v1572 = vsel %vm1524, 1, 0
      %v1573 = vsel %vm1525, 1, 0
      %v1574 = vsel %vm1526, 1, 0
      %v1575 = vsel %vm1527, 1, 0
      %v1576 = vsel %vm1528, 1, 0
      %v1577 = vsel %vm1529, 1, 0
      %v1578 = vsel %vm1530, 1, 0
      %v1579 = vsel %vm1531, 1, 0
      %v1580 = vsel %vm1532, 1, 0
      %v1581 = vsel %vm1533, 1, 0
      %v1582 = vsel %vm1534, 1, 0
      %v1583 = vsel %vm1535, 1, 0
      %v1584 = vsel %vm1536, 1, 0
      %v1585 = vsel %vm1537, 1, 0
      %v1586 = vsel %vm1538, 1, 0
      %v1587 = vsel %vm1539, 1, 0
      %v1588 = vsel %vm1540, 1, 0
      %v1589 = vsel %vm1541, 1, 0
      %v1590 = vsel %vm1542, 1, 0
      %v1591 = vsel %vm1543, 1, 0
      %v1592 = vsel %vm1544, 1, 0
      %v1593 = vsel %vm1545, 1, 0
      %v1594 = vsel %vm1546, 1, 0
      %v1595 = vsel %vm1547, 1, 0
      %v1596 = vsel %vm1548, 1, 0
      %v1597 = vsel %vm1549, 1, 0
      %v1598 = vsel %vm1550, 1, 0
      %v1599 = vsel %vm1551, 1, 0
      %v1600 = vsel %vm1552, 1, 0
      %v1601 = vsel %vm1553, 1, 0
      %v1602 = vsel %vm1554, 1, 0
      %v1603 = vsel %vm1555, 1, 0
      %v1604 = vsel %vm1556, 1, 0
      %v1605 = vcvt.s32.f32 %v1557
      %v1606 = vcvt.s32.f32 %v1558
      %v1607 = vcvt.s32.f32 %v1559
      %v1608 = vcvt.s32.f32 %v1560
      %v1609 = vcvt.s32.f32 %v1561
      %v1610 = vcvt.s32.f32 %v1562
      %v1611 = vcvt.s32.f32 %v1563
      %v1612 = vcvt.s32.f32 %v1564
      %v1613 = vcvt.s32.f32 %v1565
      %v1614 = vcvt.s32.f32 %v1566
      %v1615 = vcvt.s32.f32 %v1567
      %v1616 = vcvt.s32.f32 %v1568
      %v1617 = vcvt.s32.f32 %v1569
      %v1618 = vcvt.s32.f32 %v1570
      %v1619 = vcvt.s32.f32 %v1571
      %v1620 = vcvt.s32.f32 %v1572
      %v1621 = vcvt.s32.f32 %v1573
      %v1622 = vcvt.s32.f32 %v1574
      %v1623 = vcvt.s32.f32 %v1575
      %v1624 = vcvt.s32.f32 %v1576
      %v1625 = vcvt.s32.f32 %v1577
      %v1626 = vcvt.s32.f32 %v1578
      %v1627 = vcvt.s32.f32 %v1579
      %v1628 = vcvt.s32.f32 %v1580
      %v1629 = vcvt.s32.f32 %v1581
      %v1630 = vcvt.s32.f32 %v1582
      %v1631 = vcvt.s32.f32 %v1583
      %v1632 = vcvt.s32.f32 %v1584
      %v1633 = vcvt.s32.f32 %v1585
      %v1634 = vcvt.s32.f32 %v1586
      %v1635 = vcvt.s32.f32 %v1587
      %v1636 = vcvt.s32.f32 %v1588
      %v1637 = vcvt.s32.f32 %v1589
      %v1638 = vcvt.s32.f32 %v1590
      %v1639 = vcvt.s32.f32 %v1591
      %v1640 = vcvt.s32.f32 %v1592
      %v1641 = vcvt.s32.f32 %v1593
      %v1642 = vcvt.s32.f32 %v1594
      %v1643 = vcvt.s32.f32 %v1595
      %v1644 = vcvt.s32.f32 %v1596
      %v1645 = vcvt.s32.f32 %v1597
      %v1646 = vcvt.s32.f32 %v1598
      %v1647 = vcvt.s32.f32 %v1599
      %v1648 = vcvt.s32.f32 %v1600
      %v1649 = vcvt.s32.f32 %v1601
      %v1650 = vcvt.s32.f32 %v1602
      %v1651 = vcvt.s32.f32 %v1603
      %v1652 = vcvt.s32.f32 %v1604
      %1653 = vmatprep.subr.mxu0 0.0
      %1654 = vmatpush1.msra.mxu0 %v1605
      %1655 = vmatprep.subr.mxu0 0.0
      %1656 = vmatpush1.msra.mxu0 %v1606
      %1657 = vmatprep.subr.mxu0 0.0
      %1658 = vmatpush1.msra.mxu0 %v1607
      %1659 = vmatprep.subr.mxu0 0.0
      %1660 = vmatpush1.msra.mxu0 %v1608
      %1661 = vmatprep.subr.mxu0 0.0
      %1662 = vmatpush1.msra.mxu0 %v1609
      %1663 = vmatprep.subr.mxu0 0.0
      %1664 = vmatpush1.msra.mxu0 %v1610
      %1665 = vmatprep.subr.mxu0 0.0
      %1666 = vmatpush1.msra.mxu0 %v1611
      %1667 = vmatprep.subr.mxu0 0.0
      %1668 = vmatpush1.msra.mxu0 %v1612
      %1669 = vmatprep.subr.mxu0 0.0
      %1670 = vmatpush1.msra.mxu0 %v1613
      %1671 = vmatprep.subr.mxu0 0.0
      %1672 = vmatpush1.msra.mxu0 %v1614
      %1673 = vmatprep.subr.mxu0 0.0
      %1674 = vmatpush1.msra.mxu0 %v1615
      %1675 = vmatprep.subr.mxu0 0.0
      %1676 = vmatpush1.msra.mxu0 %v1616
      %1677 = vmatprep.subr.mxu0 0.0
      %1678 = vmatpush1.msra.mxu0 %v1617
      %1679 = vmatprep.subr.mxu0 0.0
      %1680 = vmatpush1.msra.mxu0 %v1618
      %1681 = vmatprep.subr.mxu0 0.0
      %1682 = vmatpush1.msra.mxu0 %v1619
      %1683 = vmatprep.subr.mxu0 0.0
      %1684 = vmatpush1.msra.mxu0 %v1620
      %1685 = vmatprep.subr.mxu0 0.0
      %1686 = vmatpush1.msra.mxu0 %v1621
      %1687 = vmatprep.subr.mxu0 0.0
      %1688 = vmatpush1.msra.mxu0 %v1622
      %1689 = vmatprep.subr.mxu0 0.0
      %1690 = vmatpush1.msra.mxu0 %v1623
      %1691 = vmatprep.subr.mxu0 0.0
      %1692 = vmatpush1.msra.mxu0 %v1624
      %1693 = vmatprep.subr.mxu0 0.0
      %1694 = vmatpush1.msra.mxu0 %v1625
      %1695 = vmatprep.subr.mxu0 0.0
      %1696 = vmatpush1.msra.mxu0 %v1626
      %1697 = vmatprep.subr.mxu0 0.0
      %1698 = vmatpush1.msra.mxu0 %v1627
      %1699 = vmatprep.subr.mxu0 0.0
      %1700 = vmatpush1.msra.mxu0 %v1628
      %1701 = vmatprep.subr.mxu0 0.0
      %1702 = vmatpush1.msra.mxu0 %v1629
      %1703 = vmatprep.subr.mxu0 0.0
      %1704 = vmatpush1.msra.mxu0 %v1630
      %1705 = vmatprep.subr.mxu0 0.0
      %1706 = vmatpush1.msra.mxu0 %v1631
      %1707 = vmatprep.subr.mxu0 0.0
      %1708 = vmatpush1.msra.mxu0 %v1632
      %1709 = vmatprep.subr.mxu0 0.0
      %1710 = vmatpush1.msra.mxu0 %v1633
      %1711 = vmatprep.subr.mxu0 0.0
      %1712 = vmatpush1.msra.mxu0 %v1634
      %1713 = vmatprep.subr.mxu0 0.0
      %1714 = vmatpush1.msra.mxu0 %v1635
      %1715 = vmatprep.subr.mxu0 0.0
      %1716 = vmatpush1.msra.mxu0 %v1636
      %1717 = vmatprep.mubr.f32.mxu0 %v513
      %1718 = vmatmul.mubr.f32.gmra.mrb[0].mxu0 %v511
      %v1719 = vpop.f32.mrb[0].mxu0
      %v1720 = vadd.f32 0.0, %v1719
      %v1721 = vpop.f32.mrb[0].mxu0
      %1722 = vmatprep.mubr.f32.mxu0 %v519
      %1723 = vmatmul.mubr.f32.gmra.mrb[0].mxu0 %v517
      %v1724 = vpop.f32.mrb[0].mxu0
      %v1725 = vadd.f32 0.0, %v1724
      %v1726 = vpop.f32.mrb[0].mxu0
      %1727 = vdwg.mxu0
      %1728 = vmatprep.subr.mxu0 0.0
      %1729 = vmatpush1.msra.mxu0 %v1637
      %1730 = vmatprep.subr.mxu0 0.0
      %1731 = vmatpush1.msra.mxu0 %v1638
      %1732 = vmatprep.subr.mxu0 0.0
      %1733 = vmatpush1.msra.mxu0 %v1639
      %1734 = vmatprep.subr.mxu0 0.0
      %1735 = vmatpush1.msra.mxu0 %v1640
      %1736 = vmatprep.subr.mxu0 0.0
      %1737 = vmatpush1.msra.mxu0 %v1641
      %1738 = vmatprep.subr.mxu0 0.0
      %1739 = vmatpush1.msra.mxu0 %v1642
      %1740 = vmatprep.subr.mxu0 0.0
      %1741 = vmatpush1.msra.mxu0 %v1643
      %1742 = vmatprep.subr.mxu0 0.0
      %1743 = vmatpush1.msra.mxu0 %v1644
      %1744 = vmatprep.subr.mxu0 0.0
      %1745 = vmatpush1.msra.mxu0 %v1645
      %1746 = vmatprep.subr.mxu0 0.0
      %1747 = vmatpush1.msra.mxu0 %v1646
      %1748 = vmatprep.subr.mxu0 0.0
      %1749 = vmatpush1.msra.mxu0 %v1647
      %1750 = vmatprep.subr.mxu0 0.0
      %1751 = vmatpush1.msra.mxu0 %v1648
      %1752 = vmatprep.subr.mxu0 0.0
      %1753 = vmatpush1.msra.mxu0 %v1649
      %1754 = vmatprep.subr.mxu0 0.0
      %1755 = vmatpush1.msra.mxu0 %v1650
      %1756 = vmatprep.subr.mxu0 0.0
      %1757 = vmatpush1.msra.mxu0 %v1651
      %1758 = vmatprep.subr.mxu0 0.0
      %1759 = vmatpush1.msra.mxu0 %v1652
      %1760 = vmatprep.subr.mxu0 0.0
      %1761 = vmatpush1.msra.mxu0 0.0
      %1762 = vmatprep.subr.mxu0 0.0
      %1763 = vmatpush1.msra.mxu0 0.0
      %1764 = vmatprep.subr.mxu0 0.0
      %1765 = vmatpush1.msra.mxu0 0.0
      %1766 = vmatprep.subr.mxu0 0.0
      %1767 = vmatpush1.msra.mxu0 0.0
      %1768 = vmatprep.subr.mxu0 0.0
      %1769 = vmatpush1.msra.mxu0 0.0
      %1770 = vmatprep.subr.mxu0 0.0
      %1771 = vmatpush1.msra.mxu0 0.0
      %1772 = vmatprep.subr.mxu0 0.0
      %1773 = vmatpush1.msra.mxu0 0.0
      %1774 = vmatprep.subr.mxu0 0.0
      %1775 = vmatpush1.msra.mxu0 0.0
      %1776 = vmatprep.subr.mxu0 0.0
      %1777 = vmatpush1.msra.mxu0 0.0
      %1778 = vmatprep.subr.mxu0 0.0
      %1779 = vmatpush1.msra.mxu0 0.0
      %1780 = vmatprep.subr.mxu0 0.0
      %1781 = vmatpush1.msra.mxu0 0.0
      %1782 = vmatprep.subr.mxu0 0.0
      %1783 = vmatpush1.msra.mxu0 0.0
      %1784 = vmatprep.subr.mxu0 0.0
      %1785 = vmatpush1.msra.mxu0 0.0
      %1786 = vmatprep.subr.mxu0 0.0
      %1787 = vmatpush1.msra.mxu0 0.0
      %1788 = vmatprep.subr.mxu0 0.0
      %1789 = vmatpush1.msra.mxu0 0.0
      %1790 = vmatprep.subr.mxu0 0.0
      %1791 = vmatpush1.msra.mxu0 0.0
      %1792 = vmatprep.mubr.f32.mxu0 0.0
      %1793 = vmatmul.mubr.f32.gmra.mrb[0].mxu0 %v588
      %v1794 = vpop.f32.mrb[0].mxu0
      %v1795 = vadd.f32 %v1720, %v1794
      %v1796 = vpop.f32.mrb[0].mxu0
      %1797 = vmatprep.mubr.f32.mxu0 0.0
      %1798 = vmatmul.mubr.f32.gmra.mrb[0].mxu0 %v593
      %v1799 = vpop.f32.mrb[0].mxu0
      %v1800 = vadd.f32 %v1725, %v1799
      %v1801 = vpop.f32.mrb[0].mxu0
      %1802 = vdwg.mxu0
      %v1803 = vmul.f32 %v511, %v511
      %v1804 = vmul.f32 %v513, %v513
      %v1805 = vmul.f32 %v588, %v588
      %v1806 = vmul.f32 %v517, %v517
      %v1807 = vmul.f32 %v519, %v519
      %v1808 = vmul.f32 %v593, %v593
      %1809 = vmatprep.subr.mxu0 0.0
      %1810 = vmatpush1.msra.mxu0 %v1605
      %1811 = vmatprep.subr.mxu0 0.0
      %1812 = vmatpush1.msra.mxu0 %v1606
      %1813 = vmatprep.subr.mxu0 0.0
      %1814 = vmatpush1.msra.mxu0 %v1607
      %1815 = vmatprep.subr.mxu0 0.0
      %1816 = vmatpush1.msra.mxu0 %v1608
      %1817 = vmatprep.subr.mxu0 0.0
      %1818 = vmatpush1.msra.mxu0 %v1609
      %1819 = vmatprep.subr.mxu0 0.0
      %1820 = vmatpush1.msra.mxu0 %v1610
      %1821 = vmatprep.subr.mxu0 0.0
      %1822 = vmatpush1.msra.mxu0 %v1611
      %1823 = vmatprep.subr.mxu0 0.0
      %1824 = vmatpush1.msra.mxu0 %v1612
      %1825 = vmatprep.subr.mxu0 0.0
      %1826 = vmatpush1.msra.mxu0 %v1613
      %1827 = vmatprep.subr.mxu0 0.0
      %1828 = vmatpush1.msra.mxu0 %v1614
      %1829 = vmatprep.subr.mxu0 0.0
      %1830 = vmatpush1.msra.mxu0 %v1615
      %1831 = vmatprep.subr.mxu0 0.0
      %1832 = vmatpush1.msra.mxu0 %v1616
      %1833 = vmatprep.subr.mxu0 0.0
      %1834 = vmatpush1.msra.mxu0 %v1617
      %1835 = vmatprep.subr.mxu0 0.0
      %1836 = vmatpush1.msra.mxu0 %v1618
      %1837 = vmatprep.subr.mxu0 0.0
      %1838 = vmatpush1.msra.mxu0 %v1619
      %1839 = vmatprep.subr.mxu0 0.0
      %1840 = vmatpush1.msra.mxu0 %v1620
      %1841 = vmatprep.subr.mxu0 0.0
      %1842 = vmatpush1.msra.mxu0 %v1621
      %1843 = vmatprep.subr.mxu0 0.0
      %1844 = vmatpush1.msra.mxu0 %v1622
      %1845 = vmatprep.subr.mxu0 0.0
      %1846 = vmatpush1.msra.mxu0 %v1623
      %1847 = vmatprep.subr.mxu0 0.0
      %1848 = vmatpush1.msra.mxu0 %v1624
      %1849 = vmatprep.subr.mxu0 0.0
      %1850 = vmatpush1.msra.mxu0 %v1625
      %1851 = vmatprep.subr.mxu0 0.0
      %1852 = vmatpush1.msra.mxu0 %v1626
      %1853 = vmatprep.subr.mxu0 0.0
      %1854 = vmatpush1.msra.mxu0 %v1627
      %1855 = vmatprep.subr.mxu0 0.0
      %1856 = vmatpush1.msra.mxu0 %v1628
      %1857 = vmatprep.subr.mxu0 0.0
      %1858 = vmatpush1.msra.mxu0 %v1629
      %1859 = vmatprep.subr.mxu0 0.0
      %1860 = vmatpush1.msra.mxu0 %v1630
      %1861 = vmatprep.subr.mxu0 0.0
      %1862 = vmatpush1.msra.mxu0 %v1631
      %1863 = vmatprep.subr.mxu0 0.0
      %1864 = vmatpush1.msra.mxu0 %v1632
      %1865 = vmatprep.subr.mxu0 0.0
      %1866 = vmatpush1.msra.mxu0 %v1633
      %1867 = vmatprep.subr.mxu0 0.0
      %1868 = vmatpush1.msra.mxu0 %v1634
      %1869 = vmatprep.subr.mxu0 0.0
      %1870 = vmatpush1.msra.mxu0 %v1635
      %1871 = vmatprep.subr.mxu0 0.0
      %1872 = vmatpush1.msra.mxu0 %v1636
      %1873 = vmatprep.mubr.f32.mxu0 %v1804
      %1874 = vmatmul.mubr.f32.gmra.mrb[0].mxu0 %v1803
      %v1875 = vpop.f32.mrb[0].mxu0
      %v1876 = vadd.f32 0.0, %v1875
      %v1877 = vpop.f32.mrb[0].mxu0
      %1878 = vmatprep.mubr.f32.mxu0 %v1807
      %1879 = vmatmul.mubr.f32.gmra.mrb[0].mxu0 %v1806
      %v1880 = vpop.f32.mrb[0].mxu0
      %v1881 = vadd.f32 0.0, %v1880
      %v1882 = vpop.f32.mrb[0].mxu0
      %1883 = vdwg.mxu0
      %1884 = vmatprep.subr.mxu0 0.0
      %1885 = vmatpush1.msra.mxu0 %v1637
      %1886 = vmatprep.subr.mxu0 0.0
      %1887 = vmatpush1.msra.mxu0 %v1638
      %1888 = vmatprep.subr.mxu0 0.0
      %1889 = vmatpush1.msra.mxu0 %v1639
      %1890 = vmatprep.subr.mxu0 0.0
      %1891 = vmatpush1.msra.mxu0 %v1640
      %1892 = vmatprep.subr.mxu0 0.0
      %1893 = vmatpush1.msra.mxu0 %v1641
      %1894 = vmatprep.subr.mxu0 0.0
      %1895 = vmatpush1.msra.mxu0 %v1642
      %1896 = vmatprep.subr.mxu0 0.0
      %1897 = vmatpush1.msra.mxu0 %v1643
      %1898 = vmatprep.subr.mxu0 0.0
      %1899 = vmatpush1.msra.mxu0 %v1644
      %1900 = vmatprep.subr.mxu0 0.0
      %1901 = vmatpush1.msra.mxu0 %v1645
      %1902 = vmatprep.subr.mxu0 0.0
      %1903 = vmatpush1.msra.mxu0 %v1646
      %1904 = vmatprep.subr.mxu0 0.0
      %1905 = vmatpush1.msra.mxu0 %v1647
      %1906 = vmatprep.subr.mxu0 0.0
      %1907 = vmatpush1.msra.mxu0 %v1648
      %1908 = vmatprep.subr.mxu0 0.0
      %1909 = vmatpush1.msra.mxu0 %v1649
      %1910 = vmatprep.subr.mxu0 0.0
      %1911 = vmatpush1.msra.mxu0 %v1650
      %1912 = vmatprep.subr.mxu0 0.0
      %1913 = vmatpush1.msra.mxu0 %v1651
      %1914 = vmatprep.subr.mxu0 0.0
      %1915 = vmatpush1.msra.mxu0 %v1652
      %1916 = vmatprep.subr.mxu0 0.0
      %1917 = vmatpush1.msra.mxu0 0.0
      %1918 = vmatprep.subr.mxu0 0.0
      %1919 = vmatpush1.msra.mxu0 0.0
      %1920 = vmatprep.subr.mxu0 0.0
      %1921 = vmatpush1.msra.mxu0 0.0
      %1922 = vmatprep.subr.mxu0 0.0
      %1923 = vmatpush1.msra.mxu0 0.0
      %1924 = vmatprep.subr.mxu0 0.0
      %1925 = vmatpush1.msra.mxu0 0.0
      %1926 = vmatprep.subr.mxu0 0.0
      %1927 = vmatpush1.msra.mxu0 0.0
      %1928 = vmatprep.subr.mxu0 0.0
      %1929 = vmatpush1.msra.mxu0 0.0
      %1930 = vmatprep.subr.mxu0 0.0
      %1931 = vmatpush1.msra.mxu0 0.0
      %1932 = vmatprep.subr.mxu0 0.0
      %1933 = vmatpush1.msra.mxu0 0.0
      %1934 = vmatprep.subr.mxu0 0.0
      %1935 = vmatpush1.msra.mxu0 0.0
      %1936 = vmatprep.subr.mxu0 0.0
      %1937 = vmatpush1.msra.mxu0 0.0
      %1938 = vmatprep.subr.mxu0 0.0
      %1939 = vmatpush1.msra.mxu0 0.0
      %1940 = vmatprep.subr.mxu0 0.0
      %1941 = vmatpush1.msra.mxu0 0.0
      %1942 = vmatprep.subr.mxu0 0.0
      %1943 = vmatpush1.msra.mxu0 0.0
      %1944 = vmatprep.subr.mxu0 0.0
      %1945 = vmatpush1.msra.mxu0 0.0
      %1946 = vmatprep.subr.mxu0 0.0
      %1947 = vmatpush1.msra.mxu0 0.0
      %1948 = vmatprep.mubr.f32.mxu0 0.0
      %1949 = vmatmul.mubr.f32.gmra.mrb[0].mxu0 %v1805
      %v1950 = vpop.f32.mrb[0].mxu0
      %v1951 = vadd.f32 %v1876, %v1950
      %v1952 = vpop.f32.mrb[0].mxu0
      %1953 = vmatprep.mubr.f32.mxu0 0.0
      %1954 = vmatmul.mubr.f32.gmra.mrb[0].mxu0 %v1808
      %v1955 = vpop.f32.mrb[0].mxu0
      %v1956 = vadd.f32 %v1881, %v1955
      %v1957 = vpop.f32.mrb[0].mxu0
      %1958 = vdwg.mxu0
      %v1959 = vmul.f32 %v1795, 0.00390625
      %v1960 = vmul.f32 %v1800, 0.00390625
      %v1961 = vmul.f32 %v1951, 0.00390625
      %v1962 = vmul.f32 %v1956, 0.00390625
      %v1963 = vmul.f32 %v1959, %v1959
      %v1964 = vmul.f32 %v1960, %v1960
      %v1965 = vsub.f32 %v1961, %v1963
      %v1966 = vsub.f32 %v1962, %v1964
      %v1967 = vmax.f32 %v1965, 0.0
      %v1968 = vmax.f32 %v1966, 0.0
      %v1969 = vld [vmem:[%s270] sm:$0xff]
      %v1970 = vld [vmem:[%s270 + $0x8] sm:$0xff]
      %v1971 = vadd.f32 %v1967, 1e-05
      %v1972 = vadd.f32 %v1968, 1e-05
      %v1973 = vrsqrt.pop %v1971
      %v1974 = vrsqrt.pop %v1972
      %v1975 = vmul.f32 %v1969, %v1973
      %v1976 = vmul.f32 %v1970, %v1974
      %v1977 = vld [vmem:[%s276] sm:$0xff]
      %v1978 = vld [vmem:[%s276 + $0x8] sm:$0xff]
      %v1979 = vmul.f32 %v1959, %v1975
      %v1980 = vmul.f32 %v1960, %v1976
      %v1981 = vsub.f32 %v1977, %v1979
      %v1982 = vsub.f32 %v1978, %v1980
      %1984 = vset.pattern.permute.xlu0 0
      %1985 = vperm.xlu0 %1984, %v1975
      %v1986 = vpop.permute.xlu0 %1985
      %1989 = vset.pattern.permute.xlu0 0
      %1990 = vperm.xlu0 %1989, %v1976
      %v1991 = vpop.permute.xlu0 %1990
      %v1993 = vmul.f32 %v511, %v1986
      %v1994 = vmul.f32 %v513, %v1986
      %v1995 = vmul.f32 %v588, %v1986
      %v1996 = vmul.f32 %v517, %v1991
      %v1997 = vmul.f32 %v519, %v1991
      %v1998 = vmul.f32 %v593, %v1991
      %2000 = vset.pattern.permute.xlu0 0
      %2001 = vperm.xlu0 %2000, %v1981
      %v2002 = vpop.permute.xlu0 %2001
      %2005 = vset.pattern.permute.xlu0 0
      %2006 = vperm.xlu0 %2005, %v1982
      %v2007 = vpop.permute.xlu0 %2006
      %v2009 = vadd.f32 %v1993, %v2002
      %v2010 = vadd.f32 %v1994, %v2002
      %v2011 = vadd.f32 %v1995, %v2002
      %v2012 = vadd.f32 %v1996, %v2007
      %v2013 = vadd.f32 %v1997, %v2007
      %v2014 = vadd.f32 %v1998, %v2007
      %2015 = vst [vmem:[%s287] sm:$0xff] %v2009
      %2016 = vst [vmem:[%s287 + $0x8] sm:$0xff] %v2010
      %2017 = vst [vmem:[%s287 + $0x10] sm:$0xff] %v2011
      %2018 = vst [vmem:[%s287 + $0x18] sm:$0xff] %v2012
      %2019 = vst [vmem:[%s287 + $0x20] sm:$0xff] %v2013
      %2020 = vst [vmem:[%s287 + $0x28] sm:$0xff] %v2014
      %s2021 = smul.u32 2, %s20
      %p2022 = scmp.lt.s32.totalorder %s19, 1
      %s2023 = scalar_select %p2022, %s19, 1
      %p2024 = scmp.lt.s32.totalorder %s2021, 1
      %s2025 = scalar_select %p2024, %s2021, 1
      %s2026 = smul.addr %s2025, 3
      %s2027 = smul.addr %s2023, 6
      %s2028 = sadd.s32 %s2026, %s2027
      %s2029 = smul.addr %s2028, 8
      %s2030 = scalar_lea.vmem %s4, %s2029
      // Predicated region
      $region37: #{branch_block_apply.1} parent=35 // pred_check
        %p2031 = pneg %p151
      $region38: #{branch_block_apply.1} parent=35 // pred_check_branch
        %2033 = sbr.rel (%p2031) target = $region40
      $region39: #{branch_block_apply.1} parent=35 // pred_region
        %s2034 = smul.u32 2, %s20
      $region40: #{branch_block_apply.1} parent=35 // pred_fallthru
        _
    $region36: #{branch_block_apply.1} parent=5 // pred_fallthru
      _
    %p2035 = scmp.le.s32.totalorder 2, %s10
    // Predicated region
    $region41: #{branch_block_apply.1} parent=5 // pred_check
      %p2036 = pneg %p2035
    $region42: #{branch_block_apply.1} parent=5 // pred_check_branch
      %2038 = sbr.rel (%p2036) target = $region44
    $region43: #{branch_block_apply.1} parent=5 // pred_region
      %s2039 = ssub.s32 %s10, 2
      // Predicated region
      $region45: #{branch_block_apply.1} parent=43 // pred_check
        %p2040 = pneg %p157
      $region46: #{branch_block_apply.1} parent=43 // pred_check_branch
        %2042 = sbr.rel (%p2040) target = $region48
      $region47: #{branch_block_apply.1} parent=43 // pred_region
        %s2043 = smul.u32 2, %s22
        %p2044 = scmp.lt.s32.totalorder %s21, 1
        %s2045 = scalar_select %p2044, %s21, 1
        %p2046 = scmp.lt.s32.totalorder %s2043, 1
        %s2047 = scalar_select %p2046, %s2043, 1
        %s2048 = smul.addr %s2047, 3
        %s2049 = smul.addr %s2045, 6
        %s2050 = sadd.s32 %s2048, %s2049
        %s2051 = smul.addr %s2050, 8
        %s2052 = scalar_lea.vmem %s4, %s2051
      $region48: #{branch_block_apply.1} parent=43 // pred_fallthru
        _
    $region44: #{branch_block_apply.1} parent=5 // pred_fallthru
      _
  $region6: #{branch_block_apply.1} parent=0 // loop_footer
    %s14 = sadd.s32 1, %s10
  $region7: #{branch_block_apply.1} parent=0 // loop_footer_branch
    %9 = sbr.rel target = $region3
  $region8: #{branch_block_apply.1} parent=0 // loop_exit
    _

</llo_original>
